<compile_context>
chip_gen: v7x
topology: tpu7x:2x2x1
jax: 0.10.0
libtpu: 0.0.40
codegen_flags: <defaults>
</compile_context>

<pallas_src>
import functools

import jax
import jax.numpy as jnp
from jax import lax
from jax.experimental import pallas as pl
from jax.experimental.pallas import tpu as pltpu


def _round_up(a, b):
    return (a + b - 1) // b * b


def _num_tensorcores_per_chip():
    """TensorCores addressable by one pallas_call (v4 megacore / v7x = 2)."""
    try:
        kind = jax.devices()[0].device_kind.lower()
    except Exception:
        kind = ""
    return 2 if ("v4" in kind or "v7" in kind) else 1


def _convlstm_kernel(p_ref, w_ref, c_ref, h_out_ref, c_out_ref, *, hid):
    # One deep-K MXU matmul; the bias is folded into a padded K column.
    acc = jnp.dot(p_ref[...], w_ref[...], preferred_element_type=jnp.float32)

    # Single-tanh epilogue: sigmoid(x) = 0.5 * tanh(0.5 * x) + 0.5.
    # Gate column order matches torch.split(conv, hid, dim=1): i | f | o | g,
    # so the first 3*hid lanes are sigmoid gates and the last hid lanes are g.
    lane = lax.broadcasted_iota(jnp.int32, acc.shape, 1)
    is_sig = lane < 3 * hid
    t = jnp.tanh(jnp.where(is_sig, 0.5 * acc, acc))
    act = jnp.where(is_sig, 0.5 * t + 0.5, t)

    i = act[:, 0 * hid:1 * hid]
    f = act[:, 1 * hid:2 * hid]
    o = act[:, 2 * hid:3 * hid]
    g = act[:, 3 * hid:4 * hid]

    # Cell state stays in matmul-row layout (TM, hid): no reshape relayouts.
    c_cur = c_ref[...]
    c_next = f * c_cur + i * g
    h_next = o * jnp.tanh(c_next)

    c_out_ref[...] = c_next
    h_out_ref[...] = h_next


def conv_lstm_cell(x_nchw, h_nchw, c_nchw, weight_oihw, bias, kernel_size):
    """ConvLSTMCell.forward.  Inputs/outputs in PyTorch NCHW convention."""
    KH, KW = kernel_size
    # TODO(synk): 'same' padding below only matches nn.Conv2d(padding=k//2)
    # for odd kernel sizes (even kernels change the output shape in PyTorch).
    assert KH % 2 == 1 and KW % 2 == 1, "odd kernel sizes only"
    B, Cx, H, W = x_nchw.shape
    hid = h_nchw.shape[1]
    Cin = Cx + hid
    K = KH * KW * Cin
    Kpad = _round_up(K + 1, 128)          # +1 spare column carries the bias
    G = 4 * hid
    M = B * H * W

    # ---------------- per-generation tile selection --------------------------
    num_tc = _num_tensorcores_per_chip()

    def resident_bytes(tm):
        # double-buffered bf16 patch block + double-buffered bf16 weights
        # + 3 double-buffered (TM, hid) f32 state slabs (c_in, h_out, c_out)
        return (2 * tm * Kpad * 2) + (2 * Kpad * G * 2) + (3 * 2 * tm * hid * 4)

    VMEM_BUDGET = 12 << 20                 # conservative vs v5e's 16 MiB default
    M8 = max(8, _round_up(M, 8))
    if num_tc >= 2:
        # keep >= 2 "parallel" grid steps so both TensorCores get work (v7x/v4)
        TM = min(512, _round_up(pl.cdiv(M8, 2), 8))
    else:
        # single TensorCore (v5e/v6e): one grid step if it fits the VMEM budget
        TM = M8 if resident_bytes(M8) <= VMEM_BUDGET else 512
    while TM > 8 and resident_bytes(TM) > VMEM_BUDGET:
        TM = max(8, _round_up(TM // 2, 8))
    M_pad = _round_up(M8, TM)
    grid = (M_pad // TM,)
    vmem_limit = int(min(64 << 20, max(32 << 20, resident_bytes(TM) + (8 << 20))))

    # ---- wrapper-side layout + im2col (plain JAX, fused by XLA under jit) ----
    # TODO(synk): inside a time loop / scan, keep h and c in this kernel layout
    # across steps (skip the NCHW<->NHWC transposes) and alias c_in -> c_next
    # via input_output_aliases to avoid an extra HBM copy per step.
    x = jnp.transpose(x_nchw, (0, 2, 3, 1))               # NHWC
    h = jnp.transpose(h_nchw, (0, 2, 3, 1))
    c = jnp.transpose(c_nchw, (0, 2, 3, 1))
    combined = jnp.concatenate([x, h], axis=-1)           # (B, H, W, Cin)
    ph, pw = KH // 2, KW // 2
    cp = jnp.pad(combined, ((0, 0), (ph, ph), (pw, pw), (0, 0)))

    # TODO(synk): for large H*W on bandwidth-bound chips (esp. v5e) build the
    # patch slab inside the kernel from a haloed NHWC tile instead of
    # materializing the KH*KW-expanded im2col matrix in HBM.
    taps = [cp[:, dy:dy + H, dx:dx + W, :]
            for dy in range(KH) for dx in range(KW)]      # (dy, dx, c) order
    patches = jnp.concatenate(taps, axis=-1).reshape(M, K).astype(jnp.bfloat16)
    ones_col = jnp.ones((M, 1), jnp.bfloat16)             # bias column (=1.0)
    patches = jnp.concatenate([patches, ones_col], axis=-1)
    patches = jnp.pad(patches, ((0, M_pad - M), (0, Kpad - (K + 1))))

    # Weights: (4*hid, Cin, KH, KW) -> (KH, KW, Cin, 4*hid) -> (K, G); append
    # the bias as row K (paired with the all-ones patch column); zero-pad K.
    w2 = jnp.transpose(weight_oihw, (2, 3, 1, 0)).reshape(K, G)
    w2 = jnp.concatenate([w2, bias.reshape(1, G)], axis=0)
    w2 = jnp.pad(w2, ((0, Kpad - (K + 1)), (0, 0))).astype(jnp.bfloat16)

    # Cell state in matmul-row layout (M, hid) f32 (same bytes as NHWC).
    c_in = jnp.pad(c.reshape(M, hid).astype(jnp.float32),
                   ((0, M_pad - M), (0, 0)))

    kern = functools.partial(_convlstm_kernel, hid=hid)
    # TODO(synk): for large hid on v7x (64 MiB VMEM) add a second grid axis
    # tiling G into 256-wide slices and/or mark the weight BlockSpec with
    # pipeline_mode=pl.Buffered(1) to drop its second (constant-index) buffer.
    h2, c2 = pl.pallas_call(
        kern,
        out_shape=(jax.ShapeDtypeStruct((M_pad, hid), jnp.float32),
                   jax.ShapeDtypeStruct((M_pad, hid), jnp.float32)),
        grid_spec=pltpu.PrefetchScalarGridSpec(
            num_scalar_prefetch=0,
            grid=grid,
            in_specs=[
                pl.BlockSpec((TM, Kpad), lambda m: (m, 0)),   # patches
                pl.BlockSpec((Kpad, G), lambda m: (0, 0)),    # weights (+bias)
                pl.BlockSpec((TM, hid), lambda m: (m, 0)),    # c_cur
            ],
            out_specs=[
                pl.BlockSpec((TM, hid), lambda m: (m, 0)),    # h_next
                pl.BlockSpec((TM, hid), lambda m: (m, 0)),    # c_next
            ],
        ),
        compiler_params=pltpu.CompilerParams(
            dimension_semantics=("parallel",),
            vmem_limit_bytes=vmem_limit),
    )(patches, w2, c_in)

    # back to NCHW (drop the padded rows)
    h_next = jnp.transpose(h2[:M].reshape(B, H, W, hid), (0, 3, 1, 2))
    c_next = jnp.transpose(c2[:M].reshape(B, H, W, hid), (0, 3, 1, 2))
    return h_next, c_next


def _reference(x, h, c, weight, bias, kernel_size):
    """Pure-JAX f32 reference mirroring the PyTorch forward (NCHW)."""
    KH, KW = kernel_size
    combined = jnp.concatenate([x, h], axis=1)
    conv = lax.conv_general_dilated(
        combined, weight, window_strides=(1, 1),
        padding=((KH // 2, KH // 2), (KW // 2, KW // 2)),
        dimension_numbers=("NCHW", "OIHW", "NCHW"))
    conv = conv + bias[None, :, None, None]
    hid = h.shape[1]
    cc_i, cc_f, cc_o, cc_g = jnp.split(conv, 4, axis=1)
    i = jax.nn.sigmoid(cc_i)
    f = jax.nn.sigmoid(cc_f)
    o = jax.nn.sigmoid(cc_o)
    g = jnp.tanh(cc_g)
    c_next = f * c + i * g
    h_next = o * jnp.tanh(c_next)
    return h_next, c_next


if __name__ == "__main__":
    B, Cin_x, H, W = 2, 4, 16, 16
    hid = 32
    ksize = (3, 3)

    key = jax.random.PRNGKey(0)
    kx, kh, kc, kw_, kb = jax.random.split(key, 5)

    x = jax.random.normal(kx, (B, Cin_x, H, W), jnp.float32)
    h0 = jax.random.normal(kh, (B, hid, H, W), jnp.float32)
    c0 = jax.random.normal(kc, (B, hid, H, W), jnp.float32)

    # Deterministic synthetic parameters (PyTorch Conv2d OIHW shape).
    weight = 0.05 * jax.random.normal(kw_, (4 * hid, Cin_x + hid, *ksize),
                                      jnp.float32)
    bias = 0.05 * jax.random.normal(kb, (4 * hid,), jnp.float32)

    fn = jax.jit(conv_lstm_cell, static_argnames=("kernel_size",))
    h_next, c_next = fn(x, h0, c0, weight, bias, kernel_size=ksize)
    jax.block_until_ready((h_next, c_next))

    h_ref, c_ref = _reference(x, h0, c0, weight, bias, ksize)
    # bf16 matmul operands (f32 accumulation) -> loosened tolerance vs f32 ref.
    assert jnp.allclose(h_next, h_ref, atol=3e-2, rtol=3e-2), \
        float(jnp.max(jnp.abs(h_next - h_ref)))
    assert jnp.allclose(c_next, c_ref, atol=3e-2, rtol=3e-2), \
        float(jnp.max(jnp.abs(c_next - c_ref)))

    print("KERNEL_OK")
</pallas_src>

<mosaic_0001>
module attributes {stable_mosaic.version = 11 : i64} {
  func.func @_convlstm_kernel(%arg0: i32, %arg1: memref<512x384xbf16, #tpu.memory_space<vmem>>, %arg2: memref<384x128xbf16, #tpu.memory_space<vmem>>, %arg3: memref<512x32xf32, #tpu.memory_space<vmem>>, %arg4: memref<512x32xf32, #tpu.memory_space<vmem>>, %arg5: memref<512x32xf32, #tpu.memory_space<vmem>>) attributes {dimension_semantics = [#tpu.dimension_semantics<parallel>], iteration_bounds = array<i64: 1>, scalar_prefetch = 0 : i64, scratch_operands = 0 : i64, tpu.core_type = #tpu.core_type<tc>, window_params = [{transform_indices = @transform_0, window_bounds = array<i64: 512, 384>}, {pipeline_mode = #tpu.pipeline_mode<synchronous>, transform_indices = @transform_1, window_bounds = array<i64: 384, 128>}, {transform_indices = @transform_2, window_bounds = array<i64: 512, 32>}, {transform_indices = @transform_3, window_bounds = array<i64: 512, 32>}, {transform_indices = @transform_4, window_bounds = array<i64: 512, 32>}]} {
    %c0 = arith.constant 0 : index
    %c0_0 = arith.constant 0 : index
    %0 = vector.load %arg1[%c0, %c0_0] : memref<512x384xbf16, #tpu.memory_space<vmem>>, vector<512x384xbf16>
    %c0_1 = arith.constant 0 : index
    %c0_2 = arith.constant 0 : index
    %1 = vector.load %arg2[%c0_1, %c0_2] : memref<384x128xbf16, #tpu.memory_space<vmem>>, vector<384x128xbf16>
    %cst = arith.constant dense<0.000000e+00> : vector<512x128xf32>
    %2 = tpu.matmul %0, %1, %cst {dimension_numbers = #tpu.dot_dimension_numbers<[1], [0], [0], [1], [0, 0, 1, 1], [], []>} : vector<512x384xbf16>, vector<384x128xbf16>, vector<512x128xf32> -> vector<512x128xf32>
    %3 = tpu.iota {dimensions = array<i32: 1>} : vector<512x128xi32>
    %c96_i32 = arith.constant 96 : i32
    %4 = vector.broadcast %c96_i32 : i32 to vector<512x128xi32>
    %5 = arith.cmpi slt, %3, %4 : vector<512x128xi32>
    %cst_3 = arith.constant 5.000000e-01 : f32
    %6 = vector.broadcast %cst_3 : f32 to vector<512x128xf32>
    %7 = arith.mulf %6, %2 : vector<512x128xf32>
    %8 = arith.select %5, %7, %2 : vector<512x128xi1>, vector<512x128xf32>
    %9 = math.tanh %8 : vector<512x128xf32>
    %cst_4 = arith.constant 5.000000e-01 : f32
    %10 = vector.broadcast %cst_4 : f32 to vector<512x128xf32>
    %11 = arith.mulf %10, %9 : vector<512x128xf32>
    %cst_5 = arith.constant 5.000000e-01 : f32
    %12 = vector.broadcast %cst_5 : f32 to vector<512x128xf32>
    %13 = arith.addf %11, %12 : vector<512x128xf32>
    %14 = arith.select %5, %13, %9 : vector<512x128xi1>, vector<512x128xf32>
    %15 = vector.extract_strided_slice %14 {offsets = [0, 0], sizes = [512, 32], strides = [1, 1]} : vector<512x128xf32> to vector<512x32xf32>
    %16 = vector.extract_strided_slice %14 {offsets = [0, 32], sizes = [512, 32], strides = [1, 1]} : vector<512x128xf32> to vector<512x32xf32>
    %17 = vector.extract_strided_slice %14 {offsets = [0, 64], sizes = [512, 32], strides = [1, 1]} : vector<512x128xf32> to vector<512x32xf32>
    %18 = vector.extract_strided_slice %14 {offsets = [0, 96], sizes = [512, 32], strides = [1, 1]} : vector<512x128xf32> to vector<512x32xf32>
    %c0_6 = arith.constant 0 : index
    %c0_7 = arith.constant 0 : index
    %19 = vector.load %arg3[%c0_6, %c0_7] : memref<512x32xf32, #tpu.memory_space<vmem>>, vector<512x32xf32>
    %20 = arith.mulf %16, %19 : vector<512x32xf32>
    %21 = arith.mulf %15, %18 : vector<512x32xf32>
    %22 = arith.addf %20, %21 : vector<512x32xf32>
    %23 = math.tanh %22 : vector<512x32xf32>
    %24 = arith.mulf %17, %23 : vector<512x32xf32>
    %c0_8 = arith.constant 0 : index
    %c0_9 = arith.constant 0 : index
    %25 = vector.load %arg5[%c0_8, %c0_9] : memref<512x32xf32, #tpu.memory_space<vmem>>, vector<512x32xf32>
    tpu.vector_store %arg5[%c0_8, %c0_9], %22 {strides = array<i32>} : memref<512x32xf32, #tpu.memory_space<vmem>>, vector<512x32xf32>,
    %c0_10 = arith.constant 0 : index
    %c0_11 = arith.constant 0 : index
    %26 = vector.load %arg4[%c0_10, %c0_11] : memref<512x32xf32, #tpu.memory_space<vmem>>, vector<512x32xf32>
    tpu.vector_store %arg4[%c0_10, %c0_11], %24 {strides = array<i32>} : memref<512x32xf32, #tpu.memory_space<vmem>>, vector<512x32xf32>,
    return
  }
  func.func @transform_0(%arg0: i32) -> (i32, i32) {
    %c0_i32 = arith.constant 0 : i32
    %c0_i32_0 = arith.constant 0 : i32
    return %arg0, %c0_i32 : i32, i32
  }
  func.func @transform_1(%arg0: i32) -> (i32, i32) {
    %c0_i32 = arith.constant 0 : i32
    %c0_i32_0 = arith.constant 0 : i32
    %c0_i32_1 = arith.constant 0 : i32
    return %c0_i32, %c0_i32_0 : i32, i32
  }
  func.func @transform_2(%arg0: i32) -> (i32, i32) {
    %c0_i32 = arith.constant 0 : i32
    %c0_i32_0 = arith.constant 0 : i32
    return %arg0, %c0_i32 : i32, i32
  }
  func.func @transform_3(%arg0: i32) -> (i32, i32) {
    %c0_i32 = arith.constant 0 : i32
    %c0_i32_0 = arith.constant 0 : i32
    return %arg0, %c0_i32 : i32, i32
  }
  func.func @transform_4(%arg0: i32) -> (i32, i32) {
    %c0_i32 = arith.constant 0 : i32
    %c0_i32_0 = arith.constant 0 : i32
    return %arg0, %c0_i32 : i32, i32
  }
}

</mosaic_0001>

<llo_original>
// kernel: conv_lstm_cell.1
$region0: #{conv_lstm_cell.1}
  #allocation0 [shape = 'u32[]', space=smem, size = 0x4, offset = 0x4, fixed_abs, tag = 'smem constant byte address 0x4 - core index']
  #allocation1 [shape = 'u32[144,128]{1,0:T(1,128)}', space=vmem, size = 0x12000, scoped, tag = 'internal scratch']
  %s0 = inlined_call_operand.vmem [shape: bf16[512,384], index: 0, kind: input, shape index: {}]
  %s1 = inlined_call_operand.vmem [shape: bf16[384,128], index: 1, kind: input, shape index: {}]
  %s2 = inlined_call_operand.vmem [shape: f32[512,32], index: 2, kind: input, shape index: {}]
  %s3 = inlined_call_operand.hbm [shape: f32[512,32], index: 3, kind: output, shape index: {0}]
  %s4 = inlined_call_operand.hbm [shape: f32[512,32], index: 4, kind: output, shape index: {1}]
  %5 = xla_tuple %s3, %s4
  %s6 = sld [smem:[#allocation0]]
  $region30: #{conv_lstm_cell.1} parent=0
    _
  %s8 = ssub.s32 1, %s6
  %s9 = scalar_select 0, %s8, %s6
  $region1: #{conv_lstm_cell.1} parent=0
    #allocation2 [shape = 'u8[262144]{0}', space=vmem, size = 0x40000, scoped, tag = 'output window, operand 0, single buffered']
    #allocation3 [shape = 's32[1]{0}', space=sflag, size = 0x4, scoped, tag = 'scoped memory for conv_lstm_cell.1']
    #allocation4 [shape = 'u8[262144]{0}', space=vmem, size = 0x40000, scoped, tag = 'output window, operand 1, single buffered']
    #allocation5 [shape = 's32[1]{0}', space=sflag, size = 0x4, scoped, tag = 'scoped memory for conv_lstm_cell.1']
    %10 = vsyncpa [#allocation3], 0
    %11 = vsyncpa [#allocation5], 0
    // Predicated region
    $region2: #{conv_lstm_cell.1} parent=1 // pred_check
      _
    $region3: #{conv_lstm_cell.1} parent=1 // pred_check_branch
      %13 = sbr.rel (0) target = $region5
    $region4: #{conv_lstm_cell.1} parent=1 // pred_region
      _
    $region5: #{conv_lstm_cell.1} parent=1 // pred_fallthru
      _
    // Predicated region
    $region6: #{conv_lstm_cell.1} parent=1 // pred_check
      _
    $region7: #{conv_lstm_cell.1} parent=1 // pred_check_branch
      %15 = sbr.rel (0) target = $region9
    $region8: #{conv_lstm_cell.1} parent=1 // pred_region
      _
    $region9: #{conv_lstm_cell.1} parent=1 // pred_fallthru
      _
    // Predicated region
    $region10: #{conv_lstm_cell.1} parent=1 // pred_check
      _
    $region11: #{conv_lstm_cell.1} parent=1 // pred_check_branch
      %17 = sbr.rel (0) target = $region13
    $region12: #{conv_lstm_cell.1} parent=1 // pred_region
      _
    $region13: #{conv_lstm_cell.1} parent=1 // pred_fallthru
      _
    %v19 = vld [vmem:[%s0] sm:$0xff]
    %v20 = vld [vmem:[%s0 + $0x8] sm:$0xf]
    %v21 = vld [vmem:[%s0 + $0xc] sm:$0xff]
    %v22 = vld [vmem:[%s0 + $0x14] sm:$0xf]
    %v23 = vld [vmem:[%s0 + $0x18] sm:$0xff]
    %v24 = vld [vmem:[%s0 + $0x20] sm:$0xf]
    %v25 = vld [vmem:[%s0 + $0x24] sm:$0xff]
    %v26 = vld [vmem:[%s0 + $0x2c] sm:$0xf]
    %v27 = vld [vmem:[%s0 + $0x30] sm:$0xff]
    %v28 = vld [vmem:[%s0 + $0x38] sm:$0xf]
    %v29 = vld [vmem:[%s0 + $0x3c] sm:$0xff]
    %v30 = vld [vmem:[%s0 + $0x44] sm:$0xf]
    %v31 = vld [vmem:[%s0 + $0x48] sm:$0xff]
    %v32 = vld [vmem:[%s0 + $0x50] sm:$0xf]
    %v33 = vld [vmem:[%s0 + $0x54] sm:$0xff]
    %v34 = vld [vmem:[%s0 + $0x5c] sm:$0xf]
    %v35 = vld [vmem:[%s0 + $0x60] sm:$0xff]
    %v36 = vld [vmem:[%s0 + $0x68] sm:$0xf]
    %v37 = vld [vmem:[%s0 + $0x6c] sm:$0xff]
    %v38 = vld [vmem:[%s0 + $0x74] sm:$0xf]
    %v39 = vld [vmem:[%s0 + $0x78] sm:$0xff]
    %v40 = vld [vmem:[%s0 + $0x80] sm:$0xf]
    %v41 = vld [vmem:[%s0 + $0x84] sm:$0xff]
    %v42 = vld [vmem:[%s0 + $0x8c] sm:$0xf]
    %v43 = vld [vmem:[%s0 + $0x90] sm:$0xff]
    %v44 = vld [vmem:[%s0 + $0x98] sm:$0xf]
    %v45 = vld [vmem:[%s0 + $0x9c] sm:$0xff]
    %v46 = vld [vmem:[%s0 + $0xa4] sm:$0xf]
    %v47 = vld [vmem:[%s0 + $0xa8] sm:$0xff]
    %v48 = vld [vmem:[%s0 + $0xb0] sm:$0xf]
    %v49 = vld [vmem:[%s0 + $0xb4] sm:$0xff]
    %v50 = vld [vmem:[%s0 + $0xbc] sm:$0xf]
    %v51 = vld [vmem:[%s0 + $0xc0] sm:$0xff]
    %v52 = vld [vmem:[%s0 + $0xc8] sm:$0xf]
    %v53 = vld [vmem:[%s0 + $0xcc] sm:$0xff]
    %v54 = vld [vmem:[%s0 + $0xd4] sm:$0xf]
    %v55 = vld [vmem:[%s0 + $0xd8] sm:$0xff]
    %v56 = vld [vmem:[%s0 + $0xe0] sm:$0xf]
    %v57 = vld [vmem:[%s0 + $0xe4] sm:$0xff]
    %v58 = vld [vmem:[%s0 + $0xec] sm:$0xf]
    %v59 = vld [vmem:[%s0 + $0xf0] sm:$0xff]
    %v60 = vld [vmem:[%s0 + $0xf8] sm:$0xf]
    %v61 = vld [vmem:[%s0 + $0xfc] sm:$0xff]
    %v62 = vld [vmem:[%s0 + $0x104] sm:$0xf]
    %v63 = vld [vmem:[%s0 + $0x108] sm:$0xff]
    %v64 = vld [vmem:[%s0 + $0x110] sm:$0xf]
    %v65 = vld [vmem:[%s0 + $0x114] sm:$0xff]
    %v66 = vld [vmem:[%s0 + $0x11c] sm:$0xf]
    %v67 = vld [vmem:[%s0 + $0x120] sm:$0xff]
    %v68 = vld [vmem:[%s0 + $0x128] sm:$0xf]
    %v69 = vld [vmem:[%s0 + $0x12c] sm:$0xff]
    %v70 = vld [vmem:[%s0 + $0x134] sm:$0xf]
    %v71 = vld [vmem:[%s0 + $0x138] sm:$0xff]
    %v72 = vld [vmem:[%s0 + $0x140] sm:$0xf]
    %v73 = vld [vmem:[%s0 + $0x144] sm:$0xff]
    %v74 = vld [vmem:[%s0 + $0x14c] sm:$0xf]
    %v75 = vld [vmem:[%s0 + $0x150] sm:$0xff]
    %v76 = vld [vmem:[%s0 + $0x158] sm:$0xf]
    %v77 = vld [vmem:[%s0 + $0x15c] sm:$0xff]
    %v78 = vld [vmem:[%s0 + $0x164] sm:$0xf]
    %v79 = vld [vmem:[%s0 + $0x168] sm:$0xff]
    %v80 = vld [vmem:[%s0 + $0x170] sm:$0xf]
    %v81 = vld [vmem:[%s0 + $0x174] sm:$0xff]
    %v82 = vld [vmem:[%s0 + $0x17c] sm:$0xf]
    %v83 = vld [vmem:[%s0 + $0x180] sm:$0xff]
    %v84 = vld [vmem:[%s0 + $0x188] sm:$0xf]
    %v85 = vld [vmem:[%s0 + $0x18c] sm:$0xff]
    %v86 = vld [vmem:[%s0 + $0x194] sm:$0xf]
    %v87 = vld [vmem:[%s0 + $0x198] sm:$0xff]
    %v88 = vld [vmem:[%s0 + $0x1a0] sm:$0xf]
    %v89 = vld [vmem:[%s0 + $0x1a4] sm:$0xff]
    %v90 = vld [vmem:[%s0 + $0x1ac] sm:$0xf]
    %v91 = vld [vmem:[%s0 + $0x1b0] sm:$0xff]
    %v92 = vld [vmem:[%s0 + $0x1b8] sm:$0xf]
    %v93 = vld [vmem:[%s0 + $0x1bc] sm:$0xff]
    %v94 = vld [vmem:[%s0 + $0x1c4] sm:$0xf]
    %v95 = vld [vmem:[%s0 + $0x1c8] sm:$0xff]
    %v96 = vld [vmem:[%s0 + $0x1d0] sm:$0xf]
    %v97 = vld [vmem:[%s0 + $0x1d4] sm:$0xff]
    %v98 = vld [vmem:[%s0 + $0x1dc] sm:$0xf]
    %v99 = vld [vmem:[%s0 + $0x1e0] sm:$0xff]
    %v100 = vld [vmem:[%s0 + $0x1e8] sm:$0xf]
    %v101 = vld [vmem:[%s0 + $0x1ec] sm:$0xff]
    %v102 = vld [vmem:[%s0 + $0x1f4] sm:$0xf]
    %v103 = vld [vmem:[%s0 + $0x1f8] sm:$0xff]
    %v104 = vld [vmem:[%s0 + $0x200] sm:$0xf]
    %v105 = vld [vmem:[%s0 + $0x204] sm:$0xff]
    %v106 = vld [vmem:[%s0 + $0x20c] sm:$0xf]
    %v107 = vld [vmem:[%s0 + $0x210] sm:$0xff]
    %v108 = vld [vmem:[%s0 + $0x218] sm:$0xf]
    %v109 = vld [vmem:[%s0 + $0x21c] sm:$0xff]
    %v110 = vld [vmem:[%s0 + $0x224] sm:$0xf]
    %v111 = vld [vmem:[%s0 + $0x228] sm:$0xff]
    %v112 = vld [vmem:[%s0 + $0x230] sm:$0xf]
    %v113 = vld [vmem:[%s0 + $0x234] sm:$0xff]
    %v114 = vld [vmem:[%s0 + $0x23c] sm:$0xf]
    %v115 = vld [vmem:[%s0 + $0x240] sm:$0xff]
    %v116 = vld [vmem:[%s0 + $0x248] sm:$0xf]
    %v117 = vld [vmem:[%s0 + $0x24c] sm:$0xff]
    %v118 = vld [vmem:[%s0 + $0x254] sm:$0xf]
    %v119 = vld [vmem:[%s0 + $0x258] sm:$0xff]
    %v120 = vld [vmem:[%s0 + $0x260] sm:$0xf]
    %v121 = vld [vmem:[%s0 + $0x264] sm:$0xff]
    %v122 = vld [vmem:[%s0 + $0x26c] sm:$0xf]
    %v123 = vld [vmem:[%s0 + $0x270] sm:$0xff]
    %v124 = vld [vmem:[%s0 + $0x278] sm:$0xf]
    %v125 = vld [vmem:[%s0 + $0x27c] sm:$0xff]
    %v126 = vld [vmem:[%s0 + $0x284] sm:$0xf]
    %v127 = vld [vmem:[%s0 + $0x288] sm:$0xff]
    %v128 = vld [vmem:[%s0 + $0x290] sm:$0xf]
    %v129 = vld [vmem:[%s0 + $0x294] sm:$0xff]
    %v130 = vld [vmem:[%s0 + $0x29c] sm:$0xf]
    %v131 = vld [vmem:[%s0 + $0x2a0] sm:$0xff]
    %v132 = vld [vmem:[%s0 + $0x2a8] sm:$0xf]
    %v133 = vld [vmem:[%s0 + $0x2ac] sm:$0xff]
    %v134 = vld [vmem:[%s0 + $0x2b4] sm:$0xf]
    %v135 = vld [vmem:[%s0 + $0x2b8] sm:$0xff]
    %v136 = vld [vmem:[%s0 + $0x2c0] sm:$0xf]
    %v137 = vld [vmem:[%s0 + $0x2c4] sm:$0xff]
    %v138 = vld [vmem:[%s0 + $0x2cc] sm:$0xf]
    %v139 = vld [vmem:[%s0 + $0x2d0] sm:$0xff]
    %v140 = vld [vmem:[%s0 + $0x2d8] sm:$0xf]
    %v141 = vld [vmem:[%s0 + $0x2dc] sm:$0xff]
    %v142 = vld [vmem:[%s0 + $0x2e4] sm:$0xf]
    %v143 = vld [vmem:[%s0 + $0x2e8] sm:$0xff]
    %v144 = vld [vmem:[%s0 + $0x2f0] sm:$0xf]
    %v145 = vld [vmem:[%s0 + $0x2f4] sm:$0xff]
    %v146 = vld [vmem:[%s0 + $0x2fc] sm:$0xf]
    %v147 = vld [vmem:[%s1] sm:$0xf]
    %v148 = vld [vmem:[%s1 + $0x4] sm:$0xf]
    %v149 = vld [vmem:[%s1 + $0x8] sm:$0xf]
    %v150 = vld [vmem:[%s1 + $0xc] sm:$0xf]
    %v151 = vld [vmem:[%s1 + $0x10] sm:$0xf]
    %v152 = vld [vmem:[%s1 + $0x14] sm:$0xf]
    %v153 = vld [vmem:[%s1 + $0x18] sm:$0xf]
    %v154 = vld [vmem:[%s1 + $0x1c] sm:$0xf]
    %v155 = vld [vmem:[%s1 + $0x20] sm:$0xf]
    %v156 = vld [vmem:[%s1 + $0x24] sm:$0xf]
    %v157 = vld [vmem:[%s1 + $0x28] sm:$0xf]
    %v158 = vld [vmem:[%s1 + $0x2c] sm:$0xf]
    %v159 = vld [vmem:[%s1 + $0x30] sm:$0xf]
    %v160 = vld [vmem:[%s1 + $0x34] sm:$0xf]
    %v161 = vld [vmem:[%s1 + $0x38] sm:$0xf]
    %v162 = vld [vmem:[%s1 + $0x3c] sm:$0xf]
    %v163 = vld [vmem:[%s1 + $0x40] sm:$0xf]
    %v164 = vld [vmem:[%s1 + $0x44] sm:$0xf]
    %v165 = vld [vmem:[%s1 + $0x48] sm:$0xf]
    %v166 = vld [vmem:[%s1 + $0x4c] sm:$0xf]
    %v167 = vld [vmem:[%s1 + $0x50] sm:$0xf]
    %v168 = vld [vmem:[%s1 + $0x54] sm:$0xf]
    %v169 = vld [vmem:[%s1 + $0x58] sm:$0xf]
    %v170 = vld [vmem:[%s1 + $0x5c] sm:$0xf]
    %v171 = vld [vmem:[%s1 + $0x60] sm:$0xf]
    %v172 = vld [vmem:[%s1 + $0x64] sm:$0xf]
    %v173 = vld [vmem:[%s1 + $0x68] sm:$0xf]
    %v174 = vld [vmem:[%s1 + $0x6c] sm:$0xf]
    %v175 = vld [vmem:[%s1 + $0x70] sm:$0xf]
    %v176 = vld [vmem:[%s1 + $0x74] sm:$0xf]
    %v177 = vld [vmem:[%s1 + $0x78] sm:$0xf]
    %v178 = vld [vmem:[%s1 + $0x7c] sm:$0xf]
    %v179 = vld [vmem:[%s1 + $0x80] sm:$0xf]
    %v180 = vld [vmem:[%s1 + $0x84] sm:$0xf]
    %v181 = vld [vmem:[%s1 + $0x88] sm:$0xf]
    %v182 = vld [vmem:[%s1 + $0x8c] sm:$0xf]
    %v183 = vld [vmem:[%s1 + $0x90] sm:$0xf]
    %v184 = vld [vmem:[%s1 + $0x94] sm:$0xf]
    %v185 = vld [vmem:[%s1 + $0x98] sm:$0xf]
    %v186 = vld [vmem:[%s1 + $0x9c] sm:$0xf]
    %v187 = vld [vmem:[%s1 + $0xa0] sm:$0xf]
    %v188 = vld [vmem:[%s1 + $0xa4] sm:$0xf]
    %v189 = vld [vmem:[%s1 + $0xa8] sm:$0xf]
    %v190 = vld [vmem:[%s1 + $0xac] sm:$0xf]
    %v191 = vld [vmem:[%s1 + $0xb0] sm:$0xf]
    %v192 = vld [vmem:[%s1 + $0xb4] sm:$0xf]
    %v193 = vld [vmem:[%s1 + $0xb8] sm:$0xf]
    %v194 = vld [vmem:[%s1 + $0xbc] sm:$0xf]
    %v323 = vunpack.c.l.b16 %v19
    %v324 = vunpack.c.h.b16 %v19
    %v325 = vunpack.c.l.b16 %v20
    %v326 = vunpack.c.l.b16 %v21
    %v327 = vunpack.c.h.b16 %v21
    %v328 = vunpack.c.l.b16 %v22
    %v329 = vunpack.c.l.b16 %v23
    %v330 = vunpack.c.h.b16 %v23
    %v331 = vunpack.c.l.b16 %v24
    %v332 = vunpack.c.l.b16 %v25
    %v333 = vunpack.c.h.b16 %v25
    %v334 = vunpack.c.l.b16 %v26
    %v335 = vunpack.c.l.b16 %v27
    %v336 = vunpack.c.h.b16 %v27
    %v337 = vunpack.c.l.b16 %v28
    %v338 = vunpack.c.l.b16 %v29
    %v339 = vunpack.c.h.b16 %v29
    %v340 = vunpack.c.l.b16 %v30
    %v341 = vunpack.c.l.b16 %v31
    %v342 = vunpack.c.h.b16 %v31
    %v343 = vunpack.c.l.b16 %v32
    %v344 = vunpack.c.l.b16 %v33
    %v345 = vunpack.c.h.b16 %v33
    %v346 = vunpack.c.l.b16 %v34
    %v347 = vunpack.c.l.b16 %v35
    %v348 = vunpack.c.h.b16 %v35
    %v349 = vunpack.c.l.b16 %v36
    %v350 = vunpack.c.l.b16 %v37
    %v351 = vunpack.c.h.b16 %v37
    %v352 = vunpack.c.l.b16 %v38
    %v353 = vunpack.c.l.b16 %v39
    %v354 = vunpack.c.h.b16 %v39
    %v355 = vunpack.c.l.b16 %v40
    %v356 = vunpack.c.l.b16 %v41
    %v357 = vunpack.c.h.b16 %v41
    %v358 = vunpack.c.l.b16 %v42
    %v359 = vunpack.c.l.b16 %v43
    %v360 = vunpack.c.h.b16 %v43
    %v361 = vunpack.c.l.b16 %v44
    %v362 = vunpack.c.l.b16 %v45
    %v363 = vunpack.c.h.b16 %v45
    %v364 = vunpack.c.l.b16 %v46
    %v365 = vunpack.c.l.b16 %v47
    %v366 = vunpack.c.h.b16 %v47
    %v367 = vunpack.c.l.b16 %v48
    %v368 = vunpack.c.l.b16 %v49
    %v369 = vunpack.c.h.b16 %v49
    %v370 = vunpack.c.l.b16 %v50
    %v371 = vunpack.c.l.b16 %v51
    %v372 = vunpack.c.h.b16 %v51
    %v373 = vunpack.c.l.b16 %v52
    %v374 = vunpack.c.l.b16 %v53
    %v375 = vunpack.c.h.b16 %v53
    %v376 = vunpack.c.l.b16 %v54
    %v377 = vunpack.c.l.b16 %v55
    %v378 = vunpack.c.h.b16 %v55
    %v379 = vunpack.c.l.b16 %v56
    %v380 = vunpack.c.l.b16 %v57
    %v381 = vunpack.c.h.b16 %v57
    %v382 = vunpack.c.l.b16 %v58
    %v383 = vunpack.c.l.b16 %v59
    %v384 = vunpack.c.h.b16 %v59
    %v385 = vunpack.c.l.b16 %v60
    %v386 = vunpack.c.l.b16 %v61
    %v387 = vunpack.c.h.b16 %v61
    %v388 = vunpack.c.l.b16 %v62
    %v389 = vunpack.c.l.b16 %v63
    %v390 = vunpack.c.h.b16 %v63
    %v391 = vunpack.c.l.b16 %v64
    %v392 = vunpack.c.l.b16 %v65
    %v393 = vunpack.c.h.b16 %v65
    %v394 = vunpack.c.l.b16 %v66
    %v395 = vunpack.c.l.b16 %v67
    %v396 = vunpack.c.h.b16 %v67
    %v397 = vunpack.c.l.b16 %v68
    %v398 = vunpack.c.l.b16 %v69
    %v399 = vunpack.c.h.b16 %v69
    %v400 = vunpack.c.l.b16 %v70
    %v401 = vunpack.c.l.b16 %v71
    %v402 = vunpack.c.h.b16 %v71
    %v403 = vunpack.c.l.b16 %v72
    %v404 = vunpack.c.l.b16 %v73
    %v405 = vunpack.c.h.b16 %v73
    %v406 = vunpack.c.l.b16 %v74
    %v407 = vunpack.c.l.b16 %v75
    %v408 = vunpack.c.h.b16 %v75
    %v409 = vunpack.c.l.b16 %v76
    %v410 = vunpack.c.l.b16 %v77
    %v411 = vunpack.c.h.b16 %v77
    %v412 = vunpack.c.l.b16 %v78
    %v413 = vunpack.c.l.b16 %v79
    %v414 = vunpack.c.h.b16 %v79
    %v415 = vunpack.c.l.b16 %v80
    %v416 = vunpack.c.l.b16 %v81
    %v417 = vunpack.c.h.b16 %v81
    %v418 = vunpack.c.l.b16 %v82
    %v419 = vunpack.c.l.b16 %v83
    %v420 = vunpack.c.h.b16 %v83
    %v421 = vunpack.c.l.b16 %v84
    %v422 = vunpack.c.l.b16 %v85
    %v423 = vunpack.c.h.b16 %v85
    %v424 = vunpack.c.l.b16 %v86
    %v425 = vunpack.c.l.b16 %v87
    %v426 = vunpack.c.h.b16 %v87
    %v427 = vunpack.c.l.b16 %v88
    %v428 = vunpack.c.l.b16 %v89
    %v429 = vunpack.c.h.b16 %v89
    %v430 = vunpack.c.l.b16 %v90
    %v431 = vunpack.c.l.b16 %v91
    %v432 = vunpack.c.h.b16 %v91
    %v433 = vunpack.c.l.b16 %v92
    %v434 = vunpack.c.l.b16 %v93
    %v435 = vunpack.c.h.b16 %v93
    %v436 = vunpack.c.l.b16 %v94
    %v437 = vunpack.c.l.b16 %v95
    %v438 = vunpack.c.h.b16 %v95
    %v439 = vunpack.c.l.b16 %v96
    %v440 = vunpack.c.l.b16 %v97
    %v441 = vunpack.c.h.b16 %v97
    %v442 = vunpack.c.l.b16 %v98
    %v443 = vunpack.c.l.b16 %v99
    %v444 = vunpack.c.h.b16 %v99
    %v445 = vunpack.c.l.b16 %v100
    %v446 = vunpack.c.l.b16 %v101
    %v447 = vunpack.c.h.b16 %v101
    %v448 = vunpack.c.l.b16 %v102
    %v449 = vunpack.c.l.b16 %v103
    %v450 = vunpack.c.h.b16 %v103
    %v451 = vunpack.c.l.b16 %v104
    %v452 = vunpack.c.l.b16 %v105
    %v453 = vunpack.c.h.b16 %v105
    %v454 = vunpack.c.l.b16 %v106
    %v455 = vunpack.c.l.b16 %v107
    %v456 = vunpack.c.h.b16 %v107
    %v457 = vunpack.c.l.b16 %v108
    %v458 = vunpack.c.l.b16 %v109
    %v459 = vunpack.c.h.b16 %v109
    %v460 = vunpack.c.l.b16 %v110
    %v461 = vunpack.c.l.b16 %v111
    %v462 = vunpack.c.h.b16 %v111
    %v463 = vunpack.c.l.b16 %v112
    %v464 = vunpack.c.l.b16 %v113
    %v465 = vunpack.c.h.b16 %v113
    %v466 = vunpack.c.l.b16 %v114
    %v467 = vunpack.c.l.b16 %v115
    %v468 = vunpack.c.h.b16 %v115
    %v469 = vunpack.c.l.b16 %v116
    %v470 = vunpack.c.l.b16 %v117
    %v471 = vunpack.c.h.b16 %v117
    %v472 = vunpack.c.l.b16 %v118
    %v473 = vunpack.c.l.b16 %v119
    %v474 = vunpack.c.h.b16 %v119
    %v475 = vunpack.c.l.b16 %v120
    %v476 = vunpack.c.l.b16 %v121
    %v477 = vunpack.c.h.b16 %v121
    %v478 = vunpack.c.l.b16 %v122
    %v479 = vunpack.c.l.b16 %v123
    %v480 = vunpack.c.h.b16 %v123
    %v481 = vunpack.c.l.b16 %v124
    %v482 = vunpack.c.l.b16 %v125
    %v483 = vunpack.c.h.b16 %v125
    %v484 = vunpack.c.l.b16 %v126
    %v485 = vunpack.c.l.b16 %v127
    %v486 = vunpack.c.h.b16 %v127
    %v487 = vunpack.c.l.b16 %v128
    %v488 = vunpack.c.l.b16 %v129
    %v489 = vunpack.c.h.b16 %v129
    %v490 = vunpack.c.l.b16 %v130
    %v491 = vunpack.c.l.b16 %v131
    %v492 = vunpack.c.h.b16 %v131
    %v493 = vunpack.c.l.b16 %v132
    %v494 = vunpack.c.l.b16 %v133
    %v495 = vunpack.c.h.b16 %v133
    %v496 = vunpack.c.l.b16 %v134
    %v497 = vunpack.c.l.b16 %v135
    %v498 = vunpack.c.h.b16 %v135
    %v499 = vunpack.c.l.b16 %v136
    %v500 = vunpack.c.l.b16 %v137
    %v501 = vunpack.c.h.b16 %v137
    %v502 = vunpack.c.l.b16 %v138
    %v503 = vunpack.c.l.b16 %v139
    %v504 = vunpack.c.h.b16 %v139
    %v505 = vunpack.c.l.b16 %v140
    %v506 = vunpack.c.l.b16 %v141
    %v507 = vunpack.c.h.b16 %v141
    %v508 = vunpack.c.l.b16 %v142
    %v509 = vunpack.c.l.b16 %v143
    %v510 = vunpack.c.h.b16 %v143
    %v511 = vunpack.c.l.b16 %v144
    %v512 = vunpack.c.l.b16 %v145
    %v513 = vunpack.c.h.b16 %v145
    %v514 = vunpack.c.l.b16 %v146
    %v515 = vpack.c.b16 %v326, %v323
    %v516 = vpack.c.b16 %v327, %v324
    %v517 = vpack.c.b16 %v328, %v325
    %v518 = vpack.c.b16 %v332, %v329
    %v519 = vpack.c.b16 %v333, %v330
    %v520 = vpack.c.b16 %v334, %v331
    %v521 = vpack.c.b16 %v338, %v335
    %v522 = vpack.c.b16 %v339, %v336
    %v523 = vpack.c.b16 %v340, %v337
    %v524 = vpack.c.b16 %v344, %v341
    %v525 = vpack.c.b16 %v345, %v342
    %v526 = vpack.c.b16 %v346, %v343
    %v527 = vpack.c.b16 %v350, %v347
    %v528 = vpack.c.b16 %v351, %v348
    %v529 = vpack.c.b16 %v352, %v349
    %v530 = vpack.c.b16 %v356, %v353
    %v531 = vpack.c.b16 %v357, %v354
    %v532 = vpack.c.b16 %v358, %v355
    %v533 = vpack.c.b16 %v362, %v359
    %v534 = vpack.c.b16 %v363, %v360
    %v535 = vpack.c.b16 %v364, %v361
    %v536 = vpack.c.b16 %v368, %v365
    %v537 = vpack.c.b16 %v369, %v366
    %v538 = vpack.c.b16 %v370, %v367
    %v539 = vpack.c.b16 %v374, %v371
    %v540 = vpack.c.b16 %v375, %v372
    %v541 = vpack.c.b16 %v376, %v373
    %v542 = vpack.c.b16 %v380, %v377
    %v543 = vpack.c.b16 %v381, %v378
    %v544 = vpack.c.b16 %v382, %v379
    %v545 = vpack.c.b16 %v386, %v383
    %v546 = vpack.c.b16 %v387, %v384
    %v547 = vpack.c.b16 %v388, %v385
    %v548 = vpack.c.b16 %v392, %v389
    %v549 = vpack.c.b16 %v393, %v390
    %v550 = vpack.c.b16 %v394, %v391
    %v551 = vpack.c.b16 %v398, %v395
    %v552 = vpack.c.b16 %v399, %v396
    %v553 = vpack.c.b16 %v400, %v397
    %v554 = vpack.c.b16 %v404, %v401
    %v555 = vpack.c.b16 %v405, %v402
    %v556 = vpack.c.b16 %v406, %v403
    %v557 = vpack.c.b16 %v410, %v407
    %v558 = vpack.c.b16 %v411, %v408
    %v559 = vpack.c.b16 %v412, %v409
    %v560 = vpack.c.b16 %v416, %v413
    %v561 = vpack.c.b16 %v417, %v414
    %v562 = vpack.c.b16 %v418, %v415
    %v563 = vpack.c.b16 %v422, %v419
    %v564 = vpack.c.b16 %v423, %v420
    %v565 = vpack.c.b16 %v424, %v421
    %v566 = vpack.c.b16 %v428, %v425
    %v567 = vpack.c.b16 %v429, %v426
    %v568 = vpack.c.b16 %v430, %v427
    %v569 = vpack.c.b16 %v434, %v431
    %v570 = vpack.c.b16 %v435, %v432
    %v571 = vpack.c.b16 %v436, %v433
    %v572 = vpack.c.b16 %v440, %v437
    %v573 = vpack.c.b16 %v441, %v438
    %v574 = vpack.c.b16 %v442, %v439
    %v575 = vpack.c.b16 %v446, %v443
    %v576 = vpack.c.b16 %v447, %v444
    %v577 = vpack.c.b16 %v448, %v445
    %v578 = vpack.c.b16 %v452, %v449
    %v579 = vpack.c.b16 %v453, %v450
    %v580 = vpack.c.b16 %v454, %v451
    %v581 = vpack.c.b16 %v458, %v455
    %v582 = vpack.c.b16 %v459, %v456
    %v583 = vpack.c.b16 %v460, %v457
    %v584 = vpack.c.b16 %v464, %v461
    %v585 = vpack.c.b16 %v465, %v462
    %v586 = vpack.c.b16 %v466, %v463
    %v587 = vpack.c.b16 %v470, %v467
    %v588 = vpack.c.b16 %v471, %v468
    %v589 = vpack.c.b16 %v472, %v469
    %v590 = vpack.c.b16 %v476, %v473
    %v591 = vpack.c.b16 %v477, %v474
    %v592 = vpack.c.b16 %v478, %v475
    %v593 = vpack.c.b16 %v482, %v479
    %v594 = vpack.c.b16 %v483, %v480
    %v595 = vpack.c.b16 %v484, %v481
    %v596 = vpack.c.b16 %v488, %v485
    %v597 = vpack.c.b16 %v489, %v486
    %v598 = vpack.c.b16 %v490, %v487
    %v599 = vpack.c.b16 %v494, %v491
    %v600 = vpack.c.b16 %v495, %v492
    %v601 = vpack.c.b16 %v496, %v493
    %v602 = vpack.c.b16 %v500, %v497
    %v603 = vpack.c.b16 %v501, %v498
    %v604 = vpack.c.b16 %v502, %v499
    %v605 = vpack.c.b16 %v506, %v503
    %v606 = vpack.c.b16 %v507, %v504
    %v607 = vpack.c.b16 %v508, %v505
    %v608 = vpack.c.b16 %v512, %v509
    %v609 = vpack.c.b16 %v513, %v510
    %v610 = vpack.c.b16 %v514, %v511
    %v755 = vunpack.c.l.b16 %v147
    %v756 = vunpack.c.l.b16 %v148
    %v757 = vunpack.c.l.b16 %v149
    %v758 = vunpack.c.l.b16 %v150
    %v759 = vunpack.c.l.b16 %v151
    %v760 = vunpack.c.l.b16 %v152
    %v761 = vunpack.c.l.b16 %v153
    %v762 = vunpack.c.l.b16 %v154
    %v763 = vunpack.c.l.b16 %v155
    %v764 = vunpack.c.l.b16 %v156
    %v765 = vunpack.c.l.b16 %v157
    %v766 = vunpack.c.l.b16 %v158
    %v767 = vunpack.c.l.b16 %v159
    %v768 = vunpack.c.l.b16 %v160
    %v769 = vunpack.c.l.b16 %v161
    %v770 = vunpack.c.l.b16 %v162
    %v771 = vunpack.c.l.b16 %v163
    %v772 = vunpack.c.l.b16 %v164
    %v773 = vunpack.c.l.b16 %v165
    %v774 = vunpack.c.l.b16 %v166
    %v775 = vunpack.c.l.b16 %v167
    %v776 = vunpack.c.l.b16 %v168
    %v777 = vunpack.c.l.b16 %v169
    %v778 = vunpack.c.l.b16 %v170
    %v779 = vunpack.c.l.b16 %v171
    %v780 = vunpack.c.l.b16 %v172
    %v781 = vunpack.c.l.b16 %v173
    %v782 = vunpack.c.l.b16 %v174
    %v783 = vunpack.c.l.b16 %v175
    %v784 = vunpack.c.l.b16 %v176
    %v785 = vunpack.c.l.b16 %v177
    %v786 = vunpack.c.l.b16 %v178
    %v787 = vunpack.c.l.b16 %v179
    %v788 = vunpack.c.l.b16 %v180
    %v789 = vunpack.c.l.b16 %v181
    %v790 = vunpack.c.l.b16 %v182
    %v791 = vunpack.c.l.b16 %v183
    %v792 = vunpack.c.l.b16 %v184
    %v793 = vunpack.c.l.b16 %v185
    %v794 = vunpack.c.l.b16 %v186
    %v795 = vunpack.c.l.b16 %v187
    %v796 = vunpack.c.l.b16 %v188
    %v797 = vunpack.c.l.b16 %v189
    %v798 = vunpack.c.l.b16 %v190
    %v799 = vunpack.c.l.b16 %v191
    %v800 = vunpack.c.l.b16 %v192
    %v801 = vunpack.c.l.b16 %v193
    %v802 = vunpack.c.l.b16 %v194
    %v803 = vpack.c.b16 %v756, %v755
    %v804 = vpack.c.b16 %v758, %v757
    %v805 = vpack.c.b16 %v760, %v759
    %v806 = vpack.c.b16 %v762, %v761
    %v807 = vpack.c.b16 %v764, %v763
    %v808 = vpack.c.b16 %v766, %v765
    %v809 = vpack.c.b16 %v768, %v767
    %v810 = vpack.c.b16 %v770, %v769
    %v811 = vpack.c.b16 %v772, %v771
    %v812 = vpack.c.b16 %v774, %v773
    %v813 = vpack.c.b16 %v776, %v775
    %v814 = vpack.c.b16 %v778, %v777
    %v815 = vpack.c.b16 %v780, %v779
    %v816 = vpack.c.b16 %v782, %v781
    %v817 = vpack.c.b16 %v784, %v783
    %v818 = vpack.c.b16 %v786, %v785
    %v819 = vpack.c.b16 %v788, %v787
    %v820 = vpack.c.b16 %v790, %v789
    %v821 = vpack.c.b16 %v792, %v791
    %v822 = vpack.c.b16 %v794, %v793
    %v823 = vpack.c.b16 %v796, %v795
    %v824 = vpack.c.b16 %v798, %v797
    %v825 = vpack.c.b16 %v800, %v799
    %v826 = vpack.c.b16 %v802, %v801
    %851 = vmatprep.subr.bf16.mxu0 0
    %852 = vmatpush1.bf16.msra.mxu0 %v803
    %853 = vmatprep.subr.bf16.mxu0 0
    %854 = vmatpush1.bf16.msra.mxu0 %v804
    %855 = vmatprep.subr.bf16.mxu0 0
    %856 = vmatpush1.bf16.msra.mxu0 %v805
    %857 = vmatprep.subr.bf16.mxu0 0
    %858 = vmatpush1.bf16.msra.mxu0 %v806
    %859 = vmatprep.subr.bf16.mxu0 0
    %860 = vmatpush1.bf16.msra.mxu0 %v807
    %861 = vmatprep.subr.bf16.mxu0 0
    %862 = vmatpush1.bf16.msra.mxu0 %v808
    %863 = vmatprep.subr.bf16.mxu0 0
    %864 = vmatpush1.bf16.msra.mxu0 %v809
    %865 = vmatprep.subr.bf16.mxu0 0
    %866 = vmatpush1.bf16.msra.mxu0 %v810
    %867 = vmatprep.subr.bf16.mxu0 0
    %868 = vmatpush1.bf16.msra.mxu0 %v811
    %869 = vmatprep.subr.bf16.mxu0 0
    %870 = vmatpush1.bf16.msra.mxu0 %v812
    %871 = vmatprep.subr.bf16.mxu0 0
    %872 = vmatpush1.bf16.msra.mxu0 %v813
    %873 = vmatprep.subr.bf16.mxu0 0
    %874 = vmatpush1.bf16.msra.mxu0 %v814
    %875 = vmatprep.subr.bf16.mxu0 0
    %876 = vmatpush1.bf16.msra.mxu0 %v815
    %877 = vmatprep.subr.bf16.mxu0 0
    %878 = vmatpush1.bf16.msra.mxu0 %v816
    %879 = vmatprep.subr.bf16.mxu0 0
    %880 = vmatpush1.bf16.msra.mxu0 %v817
    %881 = vmatprep.subr.bf16.mxu0 0
    %882 = vmatpush1.bf16.msra.mxu0 %v818
    %883 = vmatprep.mubr.bf16.mxu0 %v516
    %884 = vmatmul.mubr.bf16.gmra.mrb[0].mxu0 %v515
    %v885 = vpop.f32.mrb[0].mxu0
    %v886 = vadd.f32 0.0, %v885
    %v887 = vpop.f32.mrb[0].mxu0
    %v888 = vpop.f32.mrb[0].mxu0
    %v889 = vadd.f32 0.0, %v888
    %v890 = vpop.f32.mrb[0].mxu0
    %891 = vmatprep.mubr.bf16.mxu0 %v519
    %892 = vmatmul.mubr.bf16.gmra.mrb[0].mxu0 %v518
    %v893 = vpop.f32.mrb[0].mxu0
    %v894 = vadd.f32 0.0, %v893
    %v895 = vpop.f32.mrb[0].mxu0
    %v896 = vpop.f32.mrb[0].mxu0
    %v897 = vadd.f32 0.0, %v896
    %v898 = vpop.f32.mrb[0].mxu0
    %899 = vmatprep.mubr.bf16.mxu0 %v522
    %900 = vmatmul.mubr.bf16.gmra.mrb[0].mxu0 %v521
    %v901 = vpop.f32.mrb[0].mxu0
    %v902 = vadd.f32 0.0, %v901
    %v903 = vpop.f32.mrb[0].mxu0
    %v904 = vpop.f32.mrb[0].mxu0
    %v905 = vadd.f32 0.0, %v904
    %v906 = vpop.f32.mrb[0].mxu0
    %907 = vmatprep.mubr.bf16.mxu0 %v525
    %908 = vmatmul.mubr.bf16.gmra.mrb[0].mxu0 %v524
    %v909 = vpop.f32.mrb[0].mxu0
    %v910 = vadd.f32 0.0, %v909
    %v911 = vpop.f32.mrb[0].mxu0
    %v912 = vpop.f32.mrb[0].mxu0
    %v913 = vadd.f32 0.0, %v912
    %v914 = vpop.f32.mrb[0].mxu0
    %915 = vmatprep.mubr.bf16.mxu0 %v528
    %916 = vmatmul.mubr.bf16.gmra.mrb[0].mxu0 %v527
    %v917 = vpop.f32.mrb[0].mxu0
    %v918 = vadd.f32 0.0, %v917
    %v919 = vpop.f32.mrb[0].mxu0
    %v920 = vpop.f32.mrb[0].mxu0
    %v921 = vadd.f32 0.0, %v920
    %v922 = vpop.f32.mrb[0].mxu0
    %923 = vmatprep.mubr.bf16.mxu0 %v531
    %924 = vmatmul.mubr.bf16.gmra.mrb[0].mxu0 %v530
    %v925 = vpop.f32.mrb[0].mxu0
    %v926 = vadd.f32 0.0, %v925
    %v927 = vpop.f32.mrb[0].mxu0
    %v928 = vpop.f32.mrb[0].mxu0
    %v929 = vadd.f32 0.0, %v928
    %v930 = vpop.f32.mrb[0].mxu0
    %931 = vmatprep.mubr.bf16.mxu0 %v534
    %932 = vmatmul.mubr.bf16.gmra.mrb[0].mxu0 %v533
    %v933 = vpop.f32.mrb[0].mxu0
    %v934 = vadd.f32 0.0, %v933
    %v935 = vpop.f32.mrb[0].mxu0
    %v936 = vpop.f32.mrb[0].mxu0
    %v937 = vadd.f32 0.0, %v936
    %v938 = vpop.f32.mrb[0].mxu0
    %939 = vmatprep.mubr.bf16.mxu0 %v537
    %940 = vmatmul.mubr.bf16.gmra.mrb[0].mxu0 %v536
    %v941 = vpop.f32.mrb[0].mxu0
    %v942 = vadd.f32 0.0, %v941
    %v943 = vpop.f32.mrb[0].mxu0
    %v944 = vpop.f32.mrb[0].mxu0
    %v945 = vadd.f32 0.0, %v944
    %v946 = vpop.f32.mrb[0].mxu0
    %947 = vmatprep.mubr.bf16.mxu0 %v540
    %948 = vmatmul.mubr.bf16.gmra.mrb[0].mxu0 %v539
    %v949 = vpop.f32.mrb[0].mxu0
    %v950 = vadd.f32 0.0, %v949
    %v951 = vpop.f32.mrb[0].mxu0
    %v952 = vpop.f32.mrb[0].mxu0
    %v953 = vadd.f32 0.0, %v952
    %v954 = vpop.f32.mrb[0].mxu0
    %955 = vmatprep.mubr.bf16.mxu0 %v543
    %956 = vmatmul.mubr.bf16.gmra.mrb[0].mxu0 %v542
    %v957 = vpop.f32.mrb[0].mxu0
    %v958 = vadd.f32 0.0, %v957
    %v959 = vpop.f32.mrb[0].mxu0
    %v960 = vpop.f32.mrb[0].mxu0
    %v961 = vadd.f32 0.0, %v960
    %v962 = vpop.f32.mrb[0].mxu0
    %963 = vmatprep.mubr.bf16.mxu0 %v546
    %964 = vmatmul.mubr.bf16.gmra.mrb[0].mxu0 %v545
    %v965 = vpop.f32.mrb[0].mxu0
    %v966 = vadd.f32 0.0, %v965
    %v967 = vpop.f32.mrb[0].mxu0
    %v968 = vpop.f32.mrb[0].mxu0
    %v969 = vadd.f32 0.0, %v968
    %v970 = vpop.f32.mrb[0].mxu0
    %971 = vmatprep.mubr.bf16.mxu0 %v549
    %972 = vmatmul.mubr.bf16.gmra.mrb[0].mxu0 %v548
    %v973 = vpop.f32.mrb[0].mxu0
    %v974 = vadd.f32 0.0, %v973
    %v975 = vpop.f32.mrb[0].mxu0
    %v976 = vpop.f32.mrb[0].mxu0
    %v977 = vadd.f32 0.0, %v976
    %v978 = vpop.f32.mrb[0].mxu0
    %979 = vmatprep.mubr.bf16.mxu0 %v552
    %980 = vmatmul.mubr.bf16.gmra.mrb[0].mxu0 %v551
    %v981 = vpop.f32.mrb[0].mxu0
    %v982 = vadd.f32 0.0, %v981
    %v983 = vpop.f32.mrb[0].mxu0
    %v984 = vpop.f32.mrb[0].mxu0
    %v985 = vadd.f32 0.0, %v984
    %v986 = vpop.f32.mrb[0].mxu0
    %987 = vmatprep.mubr.bf16.mxu0 %v555
    %988 = vmatmul.mubr.bf16.gmra.mrb[0].mxu0 %v554
    %v989 = vpop.f32.mrb[0].mxu0
    %v990 = vadd.f32 0.0, %v989
    %v991 = vpop.f32.mrb[0].mxu0
    %v992 = vpop.f32.mrb[0].mxu0
    %v993 = vadd.f32 0.0, %v992
    %v994 = vpop.f32.mrb[0].mxu0
    %995 = vmatprep.mubr.bf16.mxu0 %v558
    %996 = vmatmul.mubr.bf16.gmra.mrb[0].mxu0 %v557
    %v997 = vpop.f32.mrb[0].mxu0
    %v998 = vadd.f32 0.0, %v997
    %v999 = vpop.f32.mrb[0].mxu0
    %v1000 = vpop.f32.mrb[0].mxu0
    %v1001 = vadd.f32 0.0, %v1000
    %v1002 = vpop.f32.mrb[0].mxu0
    %1003 = vmatprep.mubr.bf16.mxu0 %v561
    %1004 = vmatmul.mubr.bf16.gmra.mrb[0].mxu0 %v560
    %v1005 = vpop.f32.mrb[0].mxu0
    %v1006 = vadd.f32 0.0, %v1005
    %v1007 = vpop.f32.mrb[0].mxu0
    %v1008 = vpop.f32.mrb[0].mxu0
    %v1009 = vadd.f32 0.0, %v1008
    %v1010 = vpop.f32.mrb[0].mxu0
    %1011 = vmatprep.mubr.bf16.mxu0 %v564
    %1012 = vmatmul.mubr.bf16.gmra.mrb[0].mxu0 %v563
    %v1013 = vpop.f32.mrb[0].mxu0
    %v1014 = vadd.f32 0.0, %v1013
    %v1015 = vpop.f32.mrb[0].mxu0
    %v1016 = vpop.f32.mrb[0].mxu0
    %v1017 = vadd.f32 0.0, %v1016
    %v1018 = vpop.f32.mrb[0].mxu0
    %1019 = vmatprep.mubr.bf16.mxu0 %v567
    %1020 = vmatmul.mubr.bf16.gmra.mrb[0].mxu0 %v566
    %v1021 = vpop.f32.mrb[0].mxu0
    %v1022 = vadd.f32 0.0, %v1021
    %v1023 = vpop.f32.mrb[0].mxu0
    %v1024 = vpop.f32.mrb[0].mxu0
    %v1025 = vadd.f32 0.0, %v1024
    %v1026 = vpop.f32.mrb[0].mxu0
    %1027 = vmatprep.mubr.bf16.mxu0 %v570
    %1028 = vmatmul.mubr.bf16.gmra.mrb[0].mxu0 %v569
    %v1029 = vpop.f32.mrb[0].mxu0
    %v1030 = vadd.f32 0.0, %v1029
    %v1031 = vpop.f32.mrb[0].mxu0
    %v1032 = vpop.f32.mrb[0].mxu0
    %v1033 = vadd.f32 0.0, %v1032
    %v1034 = vpop.f32.mrb[0].mxu0
    %1035 = vmatprep.mubr.bf16.mxu0 %v573
    %1036 = vmatmul.mubr.bf16.gmra.mrb[0].mxu0 %v572
    %v1037 = vpop.f32.mrb[0].mxu0
    %v1038 = vadd.f32 0.0, %v1037
    %v1039 = vpop.f32.mrb[0].mxu0
    %v1040 = vpop.f32.mrb[0].mxu0
    %v1041 = vadd.f32 0.0, %v1040
    %v1042 = vpop.f32.mrb[0].mxu0
    %1043 = vmatprep.mubr.bf16.mxu0 %v576
    %1044 = vmatmul.mubr.bf16.gmra.mrb[0].mxu0 %v575
    %v1045 = vpop.f32.mrb[0].mxu0
    %v1046 = vadd.f32 0.0, %v1045
    %v1047 = vpop.f32.mrb[0].mxu0
    %v1048 = vpop.f32.mrb[0].mxu0
    %v1049 = vadd.f32 0.0, %v1048
    %v1050 = vpop.f32.mrb[0].mxu0
    %1051 = vmatprep.mubr.bf16.mxu0 %v579
    %1052 = vmatmul.mubr.bf16.gmra.mrb[0].mxu0 %v578
    %v1053 = vpop.f32.mrb[0].mxu0
    %v1054 = vadd.f32 0.0, %v1053
    %v1055 = vpop.f32.mrb[0].mxu0
    %v1056 = vpop.f32.mrb[0].mxu0
    %v1057 = vadd.f32 0.0, %v1056
    %v1058 = vpop.f32.mrb[0].mxu0
    %1059 = vmatprep.mubr.bf16.mxu0 %v582
    %1060 = vmatmul.mubr.bf16.gmra.mrb[0].mxu0 %v581
    %v1061 = vpop.f32.mrb[0].mxu0
    %v1062 = vadd.f32 0.0, %v1061
    %v1063 = vpop.f32.mrb[0].mxu0
    %v1064 = vpop.f32.mrb[0].mxu0
    %v1065 = vadd.f32 0.0, %v1064
    %v1066 = vpop.f32.mrb[0].mxu0
    %1067 = vmatprep.mubr.bf16.mxu0 %v585
    %1068 = vmatmul.mubr.bf16.gmra.mrb[0].mxu0 %v584
    %v1069 = vpop.f32.mrb[0].mxu0
    %v1070 = vadd.f32 0.0, %v1069
    %v1071 = vpop.f32.mrb[0].mxu0
    %v1072 = vpop.f32.mrb[0].mxu0
    %v1073 = vadd.f32 0.0, %v1072
    %v1074 = vpop.f32.mrb[0].mxu0
    %1075 = vmatprep.mubr.bf16.mxu0 %v588
    %1076 = vmatmul.mubr.bf16.gmra.mrb[0].mxu0 %v587
    %v1077 = vpop.f32.mrb[0].mxu0
    %v1078 = vadd.f32 0.0, %v1077
    %v1079 = vpop.f32.mrb[0].mxu0
    %v1080 = vpop.f32.mrb[0].mxu0
    %v1081 = vadd.f32 0.0, %v1080
    %v1082 = vpop.f32.mrb[0].mxu0
    %1083 = vmatprep.mubr.bf16.mxu0 %v591
    %1084 = vmatmul.mubr.bf16.gmra.mrb[0].mxu0 %v590
    %v1085 = vpop.f32.mrb[0].mxu0
    %v1086 = vadd.f32 0.0, %v1085
    %v1087 = vpop.f32.mrb[0].mxu0
    %v1088 = vpop.f32.mrb[0].mxu0
    %v1089 = vadd.f32 0.0, %v1088
    %v1090 = vpop.f32.mrb[0].mxu0
    %1091 = vmatprep.mubr.bf16.mxu0 %v594
    %1092 = vmatmul.mubr.bf16.gmra.mrb[0].mxu0 %v593
    %v1093 = vpop.f32.mrb[0].mxu0
    %v1094 = vadd.f32 0.0, %v1093
    %v1095 = vpop.f32.mrb[0].mxu0
    %v1096 = vpop.f32.mrb[0].mxu0
    %v1097 = vadd.f32 0.0, %v1096
    %v1098 = vpop.f32.mrb[0].mxu0
    %1099 = vmatprep.mubr.bf16.mxu0 %v597
    %1100 = vmatmul.mubr.bf16.gmra.mrb[0].mxu0 %v596
    %v1101 = vpop.f32.mrb[0].mxu0
    %v1102 = vadd.f32 0.0, %v1101
    %v1103 = vpop.f32.mrb[0].mxu0
    %v1104 = vpop.f32.mrb[0].mxu0
    %v1105 = vadd.f32 0.0, %v1104
    %v1106 = vpop.f32.mrb[0].mxu0
    %1107 = vmatprep.mubr.bf16.mxu0 %v600
    %1108 = vmatmul.mubr.bf16.gmra.mrb[0].mxu0 %v599
    %v1109 = vpop.f32.mrb[0].mxu0
    %v1110 = vadd.f32 0.0, %v1109
    %v1111 = vpop.f32.mrb[0].mxu0
    %v1112 = vpop.f32.mrb[0].mxu0
    %v1113 = vadd.f32 0.0, %v1112
    %v1114 = vpop.f32.mrb[0].mxu0
    %1115 = vmatprep.mubr.bf16.mxu0 %v603
    %1116 = vmatmul.mubr.bf16.gmra.mrb[0].mxu0 %v602
    %v1117 = vpop.f32.mrb[0].mxu0
    %v1118 = vadd.f32 0.0, %v1117
    %v1119 = vpop.f32.mrb[0].mxu0
    %v1120 = vpop.f32.mrb[0].mxu0
    %v1121 = vadd.f32 0.0, %v1120
    %v1122 = vpop.f32.mrb[0].mxu0
    %1123 = vmatprep.mubr.bf16.mxu0 %v606
    %1124 = vmatmul.mubr.bf16.gmra.mrb[0].mxu0 %v605
    %v1125 = vpop.f32.mrb[0].mxu0
    %v1126 = vadd.f32 0.0, %v1125
    %v1127 = vpop.f32.mrb[0].mxu0
    %v1128 = vpop.f32.mrb[0].mxu0
    %v1129 = vadd.f32 0.0, %v1128
    %v1130 = vpop.f32.mrb[0].mxu0
    %1131 = vmatprep.mubr.bf16.mxu0 %v609
    %1132 = vmatmul.mubr.bf16.gmra.mrb[0].mxu0 %v608
    %v1133 = vpop.f32.mrb[0].mxu0
    %v1134 = vadd.f32 0.0, %v1133
    %v1135 = vpop.f32.mrb[0].mxu0
    %v1136 = vpop.f32.mrb[0].mxu0
    %v1137 = vadd.f32 0.0, %v1136
    %v1138 = vpop.f32.mrb[0].mxu0
    %1139 = vdwg.mxu0
    %1140 = vmatprep.subr.bf16.mxu0 0
    %1141 = vmatpush1.bf16.msra.mxu0 %v819
    %1142 = vmatprep.subr.bf16.mxu0 0
    %1143 = vmatpush1.bf16.msra.mxu0 %v820
    %1144 = vmatprep.subr.bf16.mxu0 0
    %1145 = vmatpush1.bf16.msra.mxu0 %v821
    %1146 = vmatprep.subr.bf16.mxu0 0
    %1147 = vmatpush1.bf16.msra.mxu0 %v822
    %1148 = vmatprep.subr.bf16.mxu0 0
    %1149 = vmatpush1.bf16.msra.mxu0 %v823
    %1150 = vmatprep.subr.bf16.mxu0 0
    %1151 = vmatpush1.bf16.msra.mxu0 %v824
    %1152 = vmatprep.subr.bf16.mxu0 0
    %1153 = vmatpush1.bf16.msra.mxu0 %v825
    %1154 = vmatprep.subr.bf16.mxu0 0
    %1155 = vmatpush1.bf16.msra.mxu0 %v826
    %1156 = vmatprep.subr.bf16.mxu0 0
    %1157 = vmatpush1.bf16.msra.mxu0 0
    %1158 = vmatprep.subr.bf16.mxu0 0
    %1159 = vmatpush1.bf16.msra.mxu0 0
    %1160 = vmatprep.subr.bf16.mxu0 0
    %1161 = vmatpush1.bf16.msra.mxu0 0
    %1162 = vmatprep.subr.bf16.mxu0 0
    %1163 = vmatpush1.bf16.msra.mxu0 0
    %1164 = vmatprep.subr.bf16.mxu0 0
    %1165 = vmatpush1.bf16.msra.mxu0 0
    %1166 = vmatprep.subr.bf16.mxu0 0
    %1167 = vmatpush1.bf16.msra.mxu0 0
    %1168 = vmatprep.subr.bf16.mxu0 0
    %1169 = vmatpush1.bf16.msra.mxu0 0
    %1170 = vmatprep.subr.bf16.mxu0 0
    %1171 = vmatpush1.bf16.msra.mxu0 0
    %1172 = vmatprep.mubr.bf16.mxu0 0
    %1173 = vmatmul.mubr.bf16.gmra.mrb[0].mxu0 %v517
    %v1174 = vpop.f32.mrb[0].mxu0
    %v1175 = vadd.f32 %v886, %v1174
    %v1176 = vpop.f32.mrb[0].mxu0
    %v1177 = vpop.f32.mrb[0].mxu0
    %v1178 = vadd.f32 %v889, %v1177
    %v1179 = vpop.f32.mrb[0].mxu0
    %1180 = vmatprep.mubr.bf16.mxu0 0
    %1181 = vmatmul.mubr.bf16.gmra.mrb[0].mxu0 %v520
    %v1182 = vpop.f32.mrb[0].mxu0
    %v1183 = vadd.f32 %v894, %v1182
    %v1184 = vpop.f32.mrb[0].mxu0
    %v1185 = vpop.f32.mrb[0].mxu0
    %v1186 = vadd.f32 %v897, %v1185
    %v1187 = vpop.f32.mrb[0].mxu0
    %1188 = vmatprep.mubr.bf16.mxu0 0
    %1189 = vmatmul.mubr.bf16.gmra.mrb[0].mxu0 %v523
    %v1190 = vpop.f32.mrb[0].mxu0
    %v1191 = vadd.f32 %v902, %v1190
    %v1192 = vpop.f32.mrb[0].mxu0
    %v1193 = vpop.f32.mrb[0].mxu0
    %v1194 = vadd.f32 %v905, %v1193
    %v1195 = vpop.f32.mrb[0].mxu0
    %1196 = vmatprep.mubr.bf16.mxu0 0
    %1197 = vmatmul.mubr.bf16.gmra.mrb[0].mxu0 %v526
    %v1198 = vpop.f32.mrb[0].mxu0
    %v1199 = vadd.f32 %v910, %v1198
    %v1200 = vpop.f32.mrb[0].mxu0
    %v1201 = vpop.f32.mrb[0].mxu0
    %v1202 = vadd.f32 %v913, %v1201
    %v1203 = vpop.f32.mrb[0].mxu0
    %1204 = vmatprep.mubr.bf16.mxu0 0
    %1205 = vmatmul.mubr.bf16.gmra.mrb[0].mxu0 %v529
    %v1206 = vpop.f32.mrb[0].mxu0
    %v1207 = vadd.f32 %v918, %v1206
    %v1208 = vpop.f32.mrb[0].mxu0
    %v1209 = vpop.f32.mrb[0].mxu0
    %v1210 = vadd.f32 %v921, %v1209
    %v1211 = vpop.f32.mrb[0].mxu0
    %1212 = vmatprep.mubr.bf16.mxu0 0
    %1213 = vmatmul.mubr.bf16.gmra.mrb[0].mxu0 %v532
    %v1214 = vpop.f32.mrb[0].mxu0
    %v1215 = vadd.f32 %v926, %v1214
    %v1216 = vpop.f32.mrb[0].mxu0
    %v1217 = vpop.f32.mrb[0].mxu0
    %v1218 = vadd.f32 %v929, %v1217
    %v1219 = vpop.f32.mrb[0].mxu0
    %1220 = vmatprep.mubr.bf16.mxu0 0
    %1221 = vmatmul.mubr.bf16.gmra.mrb[0].mxu0 %v535
    %v1222 = vpop.f32.mrb[0].mxu0
    %v1223 = vadd.f32 %v934, %v1222
    %v1224 = vpop.f32.mrb[0].mxu0
    %v1225 = vpop.f32.mrb[0].mxu0
    %v1226 = vadd.f32 %v937, %v1225
    %v1227 = vpop.f32.mrb[0].mxu0
    %1228 = vmatprep.mubr.bf16.mxu0 0
    %1229 = vmatmul.mubr.bf16.gmra.mrb[0].mxu0 %v538
    %v1230 = vpop.f32.mrb[0].mxu0
    %v1231 = vadd.f32 %v942, %v1230
    %v1232 = vpop.f32.mrb[0].mxu0
    %v1233 = vpop.f32.mrb[0].mxu0
    %v1234 = vadd.f32 %v945, %v1233
    %v1235 = vpop.f32.mrb[0].mxu0
    %1236 = vmatprep.mubr.bf16.mxu0 0
    %1237 = vmatmul.mubr.bf16.gmra.mrb[0].mxu0 %v541
    %v1238 = vpop.f32.mrb[0].mxu0
    %v1239 = vadd.f32 %v950, %v1238
    %v1240 = vpop.f32.mrb[0].mxu0
    %v1241 = vpop.f32.mrb[0].mxu0
    %v1242 = vadd.f32 %v953, %v1241
    %v1243 = vpop.f32.mrb[0].mxu0
    %1244 = vmatprep.mubr.bf16.mxu0 0
    %1245 = vmatmul.mubr.bf16.gmra.mrb[0].mxu0 %v544
    %v1246 = vpop.f32.mrb[0].mxu0
    %v1247 = vadd.f32 %v958, %v1246
    %v1248 = vpop.f32.mrb[0].mxu0
    %v1249 = vpop.f32.mrb[0].mxu0
    %v1250 = vadd.f32 %v961, %v1249
    %v1251 = vpop.f32.mrb[0].mxu0
    %1252 = vmatprep.mubr.bf16.mxu0 0
    %1253 = vmatmul.mubr.bf16.gmra.mrb[0].mxu0 %v547
    %v1254 = vpop.f32.mrb[0].mxu0
    %v1255 = vadd.f32 %v966, %v1254
    %v1256 = vpop.f32.mrb[0].mxu0
    %v1257 = vpop.f32.mrb[0].mxu0
    %v1258 = vadd.f32 %v969, %v1257
    %v1259 = vpop.f32.mrb[0].mxu0
    %1260 = vmatprep.mubr.bf16.mxu0 0
    %1261 = vmatmul.mubr.bf16.gmra.mrb[0].mxu0 %v550
    %v1262 = vpop.f32.mrb[0].mxu0
    %v1263 = vadd.f32 %v974, %v1262
    %v1264 = vpop.f32.mrb[0].mxu0
    %v1265 = vpop.f32.mrb[0].mxu0
    %v1266 = vadd.f32 %v977, %v1265
    %v1267 = vpop.f32.mrb[0].mxu0
    %1268 = vmatprep.mubr.bf16.mxu0 0
    %1269 = vmatmul.mubr.bf16.gmra.mrb[0].mxu0 %v553
    %v1270 = vpop.f32.mrb[0].mxu0
    %v1271 = vadd.f32 %v982, %v1270
    %v1272 = vpop.f32.mrb[0].mxu0
    %v1273 = vpop.f32.mrb[0].mxu0
    %v1274 = vadd.f32 %v985, %v1273
    %v1275 = vpop.f32.mrb[0].mxu0
    %1276 = vmatprep.mubr.bf16.mxu0 0
    %1277 = vmatmul.mubr.bf16.gmra.mrb[0].mxu0 %v556
    %v1278 = vpop.f32.mrb[0].mxu0
    %v1279 = vadd.f32 %v990, %v1278
    %v1280 = vpop.f32.mrb[0].mxu0
    %v1281 = vpop.f32.mrb[0].mxu0
    %v1282 = vadd.f32 %v993, %v1281
    %v1283 = vpop.f32.mrb[0].mxu0
    %1284 = vmatprep.mubr.bf16.mxu0 0
    %1285 = vmatmul.mubr.bf16.gmra.mrb[0].mxu0 %v559
    %v1286 = vpop.f32.mrb[0].mxu0
    %v1287 = vadd.f32 %v998, %v1286
    %v1288 = vpop.f32.mrb[0].mxu0
    %v1289 = vpop.f32.mrb[0].mxu0
    %v1290 = vadd.f32 %v1001, %v1289
    %v1291 = vpop.f32.mrb[0].mxu0
    %1292 = vmatprep.mubr.bf16.mxu0 0
    %1293 = vmatmul.mubr.bf16.gmra.mrb[0].mxu0 %v562
    %v1294 = vpop.f32.mrb[0].mxu0
    %v1295 = vadd.f32 %v1006, %v1294
    %v1296 = vpop.f32.mrb[0].mxu0
    %v1297 = vpop.f32.mrb[0].mxu0
    %v1298 = vadd.f32 %v1009, %v1297
    %v1299 = vpop.f32.mrb[0].mxu0
    %1300 = vmatprep.mubr.bf16.mxu0 0
    %1301 = vmatmul.mubr.bf16.gmra.mrb[0].mxu0 %v565
    %v1302 = vpop.f32.mrb[0].mxu0
    %v1303 = vadd.f32 %v1014, %v1302
    %v1304 = vpop.f32.mrb[0].mxu0
    %v1305 = vpop.f32.mrb[0].mxu0
    %v1306 = vadd.f32 %v1017, %v1305
    %v1307 = vpop.f32.mrb[0].mxu0
    %1308 = vmatprep.mubr.bf16.mxu0 0
    %1309 = vmatmul.mubr.bf16.gmra.mrb[0].mxu0 %v568
    %v1310 = vpop.f32.mrb[0].mxu0
    %v1311 = vadd.f32 %v1022, %v1310
    %v1312 = vpop.f32.mrb[0].mxu0
    %v1313 = vpop.f32.mrb[0].mxu0
    %v1314 = vadd.f32 %v1025, %v1313
    %v1315 = vpop.f32.mrb[0].mxu0
    %1316 = vmatprep.mubr.bf16.mxu0 0
    %1317 = vmatmul.mubr.bf16.gmra.mrb[0].mxu0 %v571
    %v1318 = vpop.f32.mrb[0].mxu0
    %v1319 = vadd.f32 %v1030, %v1318
    %v1320 = vpop.f32.mrb[0].mxu0
    %v1321 = vpop.f32.mrb[0].mxu0
    %v1322 = vadd.f32 %v1033, %v1321
    %v1323 = vpop.f32.mrb[0].mxu0
    %1324 = vmatprep.mubr.bf16.mxu0 0
    %1325 = vmatmul.mubr.bf16.gmra.mrb[0].mxu0 %v574
    %v1326 = vpop.f32.mrb[0].mxu0
    %v1327 = vadd.f32 %v1038, %v1326
    %v1328 = vpop.f32.mrb[0].mxu0
    %v1329 = vpop.f32.mrb[0].mxu0
    %v1330 = vadd.f32 %v1041, %v1329
    %v1331 = vpop.f32.mrb[0].mxu0
    %1332 = vmatprep.mubr.bf16.mxu0 0
    %1333 = vmatmul.mubr.bf16.gmra.mrb[0].mxu0 %v577
    %v1334 = vpop.f32.mrb[0].mxu0
    %v1335 = vadd.f32 %v1046, %v1334
    %v1336 = vpop.f32.mrb[0].mxu0
    %v1337 = vpop.f32.mrb[0].mxu0
    %v1338 = vadd.f32 %v1049, %v1337
    %v1339 = vpop.f32.mrb[0].mxu0
    %1340 = vmatprep.mubr.bf16.mxu0 0
    %1341 = vmatmul.mubr.bf16.gmra.mrb[0].mxu0 %v580
    %v1342 = vpop.f32.mrb[0].mxu0
    %v1343 = vadd.f32 %v1054, %v1342
    %v1344 = vpop.f32.mrb[0].mxu0
    %v1345 = vpop.f32.mrb[0].mxu0
    %v1346 = vadd.f32 %v1057, %v1345
    %v1347 = vpop.f32.mrb[0].mxu0
    %1348 = vmatprep.mubr.bf16.mxu0 0
    %1349 = vmatmul.mubr.bf16.gmra.mrb[0].mxu0 %v583
    %v1350 = vpop.f32.mrb[0].mxu0
    %v1351 = vadd.f32 %v1062, %v1350
    %v1352 = vpop.f32.mrb[0].mxu0
    %v1353 = vpop.f32.mrb[0].mxu0
    %v1354 = vadd.f32 %v1065, %v1353
    %v1355 = vpop.f32.mrb[0].mxu0
    %1356 = vmatprep.mubr.bf16.mxu0 0
    %1357 = vmatmul.mubr.bf16.gmra.mrb[0].mxu0 %v586
    %v1358 = vpop.f32.mrb[0].mxu0
    %v1359 = vadd.f32 %v1070, %v1358
    %v1360 = vpop.f32.mrb[0].mxu0
    %v1361 = vpop.f32.mrb[0].mxu0
    %v1362 = vadd.f32 %v1073, %v1361
    %v1363 = vpop.f32.mrb[0].mxu0
    %1364 = vmatprep.mubr.bf16.mxu0 0
    %1365 = vmatmul.mubr.bf16.gmra.mrb[0].mxu0 %v589
    %v1366 = vpop.f32.mrb[0].mxu0
    %v1367 = vadd.f32 %v1078, %v1366
    %v1368 = vpop.f32.mrb[0].mxu0
    %v1369 = vpop.f32.mrb[0].mxu0
    %v1370 = vadd.f32 %v1081, %v1369
    %v1371 = vpop.f32.mrb[0].mxu0
    %1372 = vmatprep.mubr.bf16.mxu0 0
    %1373 = vmatmul.mubr.bf16.gmra.mrb[0].mxu0 %v592
    %v1374 = vpop.f32.mrb[0].mxu0
    %v1375 = vadd.f32 %v1086, %v1374
    %v1376 = vpop.f32.mrb[0].mxu0
    %v1377 = vpop.f32.mrb[0].mxu0
    %v1378 = vadd.f32 %v1089, %v1377
    %v1379 = vpop.f32.mrb[0].mxu0
    %1380 = vmatprep.mubr.bf16.mxu0 0
    %1381 = vmatmul.mubr.bf16.gmra.mrb[0].mxu0 %v595
    %v1382 = vpop.f32.mrb[0].mxu0
    %v1383 = vadd.f32 %v1094, %v1382
    %v1384 = vpop.f32.mrb[0].mxu0
    %v1385 = vpop.f32.mrb[0].mxu0
    %v1386 = vadd.f32 %v1097, %v1385
    %v1387 = vpop.f32.mrb[0].mxu0
    %1388 = vmatprep.mubr.bf16.mxu0 0
    %1389 = vmatmul.mubr.bf16.gmra.mrb[0].mxu0 %v598
    %v1390 = vpop.f32.mrb[0].mxu0
    %v1391 = vadd.f32 %v1102, %v1390
    %v1392 = vpop.f32.mrb[0].mxu0
    %v1393 = vpop.f32.mrb[0].mxu0
    %v1394 = vadd.f32 %v1105, %v1393
    %v1395 = vpop.f32.mrb[0].mxu0
    %1396 = vmatprep.mubr.bf16.mxu0 0
    %1397 = vmatmul.mubr.bf16.gmra.mrb[0].mxu0 %v601
    %v1398 = vpop.f32.mrb[0].mxu0
    %v1399 = vadd.f32 %v1110, %v1398
    %v1400 = vpop.f32.mrb[0].mxu0
    %v1401 = vpop.f32.mrb[0].mxu0
    %v1402 = vadd.f32 %v1113, %v1401
    %v1403 = vpop.f32.mrb[0].mxu0
    %1404 = vmatprep.mubr.bf16.mxu0 0
    %1405 = vmatmul.mubr.bf16.gmra.mrb[0].mxu0 %v604
    %v1406 = vpop.f32.mrb[0].mxu0
    %v1407 = vadd.f32 %v1118, %v1406
    %v1408 = vpop.f32.mrb[0].mxu0
    %v1409 = vpop.f32.mrb[0].mxu0
    %v1410 = vadd.f32 %v1121, %v1409
    %v1411 = vpop.f32.mrb[0].mxu0
    %1412 = vmatprep.mubr.bf16.mxu0 0
    %1413 = vmatmul.mubr.bf16.gmra.mrb[0].mxu0 %v607
    %v1414 = vpop.f32.mrb[0].mxu0
    %v1415 = vadd.f32 %v1126, %v1414
    %v1416 = vpop.f32.mrb[0].mxu0
    %v1417 = vpop.f32.mrb[0].mxu0
    %v1418 = vadd.f32 %v1129, %v1417
    %v1419 = vpop.f32.mrb[0].mxu0
    %1420 = vmatprep.mubr.bf16.mxu0 0
    %1421 = vmatmul.mubr.bf16.gmra.mrb[0].mxu0 %v610
    %v1422 = vpop.f32.mrb[0].mxu0
    %v1423 = vadd.f32 %v1134, %v1422
    %v1424 = vpop.f32.mrb[0].mxu0
    %v1425 = vpop.f32.mrb[0].mxu0
    %v1426 = vadd.f32 %v1137, %v1425
    %v1427 = vpop.f32.mrb[0].mxu0
    %1428 = vdwg.mxu0
    %v1429 = vlaneseq
    %v1430 = vand.u32 %v1429, 127
    %vm1431 = vcmp.lt.s32.totalorder %v1430, 96
    %v1432 = vmul.f32 %v1175, 0.5
    %v1433 = vmul.f32 %v1178, 0.5
    %v1434 = vmul.f32 %v1183, 0.5
    %v1435 = vmul.f32 %v1186, 0.5
    %v1436 = vmul.f32 %v1191, 0.5
    %v1437 = vmul.f32 %v1194, 0.5
    %v1438 = vmul.f32 %v1199, 0.5
    %v1439 = vmul.f32 %v1202, 0.5
    %v1440 = vmul.f32 %v1207, 0.5
    %v1441 = vmul.f32 %v1210, 0.5
    %v1442 = vmul.f32 %v1215, 0.5
    %v1443 = vmul.f32 %v1218, 0.5
    %v1444 = vmul.f32 %v1223, 0.5
    %v1445 = vmul.f32 %v1226, 0.5
    %v1446 = vmul.f32 %v1231, 0.5
    %v1447 = vmul.f32 %v1234, 0.5
    %v1448 = vmul.f32 %v1239, 0.5
    %v1449 = vmul.f32 %v1242, 0.5
    %v1450 = vmul.f32 %v1247, 0.5
    %v1451 = vmul.f32 %v1250, 0.5
    %v1452 = vmul.f32 %v1255, 0.5
    %v1453 = vmul.f32 %v1258, 0.5
    %v1454 = vmul.f32 %v1263, 0.5
    %v1455 = vmul.f32 %v1266, 0.5
    %v1456 = vmul.f32 %v1271, 0.5
    %v1457 = vmul.f32 %v1274, 0.5
    %v1458 = vmul.f32 %v1279, 0.5
    %v1459 = vmul.f32 %v1282, 0.5
    %v1460 = vmul.f32 %v1287, 0.5
    %v1461 = vmul.f32 %v1290, 0.5
    %v1462 = vmul.f32 %v1295, 0.5
    %v1463 = vmul.f32 %v1298, 0.5
    %v1464 = vmul.f32 %v1303, 0.5
    %v1465 = vmul.f32 %v1306, 0.5
    %v1466 = vmul.f32 %v1311, 0.5
    %v1467 = vmul.f32 %v1314, 0.5
    %v1468 = vmul.f32 %v1319, 0.5
    %v1469 = vmul.f32 %v1322, 0.5
    %v1470 = vmul.f32 %v1327, 0.5
    %v1471 = vmul.f32 %v1330, 0.5
    %v1472 = vmul.f32 %v1335, 0.5
    %v1473 = vmul.f32 %v1338, 0.5
    %v1474 = vmul.f32 %v1343, 0.5
    %v1475 = vmul.f32 %v1346, 0.5
    %v1476 = vmul.f32 %v1351, 0.5
    %v1477 = vmul.f32 %v1354, 0.5
    %v1478 = vmul.f32 %v1359, 0.5
    %v1479 = vmul.f32 %v1362, 0.5
    %v1480 = vmul.f32 %v1367, 0.5
    %v1481 = vmul.f32 %v1370, 0.5
    %v1482 = vmul.f32 %v1375, 0.5
    %v1483 = vmul.f32 %v1378, 0.5
    %v1484 = vmul.f32 %v1383, 0.5
    %v1485 = vmul.f32 %v1386, 0.5
    %v1486 = vmul.f32 %v1391, 0.5
    %v1487 = vmul.f32 %v1394, 0.5
    %v1488 = vmul.f32 %v1399, 0.5
    %v1489 = vmul.f32 %v1402, 0.5
    %v1490 = vmul.f32 %v1407, 0.5
    %v1491 = vmul.f32 %v1410, 0.5
    %v1492 = vmul.f32 %v1415, 0.5
    %v1493 = vmul.f32 %v1418, 0.5
    %v1494 = vmul.f32 %v1423, 0.5
    %v1495 = vmul.f32 %v1426, 0.5
    %v1496 = vsel %vm1431, %v1432, %v1175
    %v1497 = vsel %vm1431, %v1433, %v1178
    %v1498 = vsel %vm1431, %v1434, %v1183
    %v1499 = vsel %vm1431, %v1435, %v1186
    %v1500 = vsel %vm1431, %v1436, %v1191
    %v1501 = vsel %vm1431, %v1437, %v1194
    %v1502 = vsel %vm1431, %v1438, %v1199
    %v1503 = vsel %vm1431, %v1439, %v1202
    %v1504 = vsel %vm1431, %v1440, %v1207
    %v1505 = vsel %vm1431, %v1441, %v1210
    %v1506 = vsel %vm1431, %v1442, %v1215
    %v1507 = vsel %vm1431, %v1443, %v1218
    %v1508 = vsel %vm1431, %v1444, %v1223
    %v1509 = vsel %vm1431, %v1445, %v1226
    %v1510 = vsel %vm1431, %v1446, %v1231
    %v1511 = vsel %vm1431, %v1447, %v1234
    %v1512 = vsel %vm1431, %v1448, %v1239
    %v1513 = vsel %vm1431, %v1449, %v1242
    %v1514 = vsel %vm1431, %v1450, %v1247
    %v1515 = vsel %vm1431, %v1451, %v1250
    %v1516 = vsel %vm1431, %v1452, %v1255
    %v1517 = vsel %vm1431, %v1453, %v1258
    %v1518 = vsel %vm1431, %v1454, %v1263
    %v1519 = vsel %vm1431, %v1455, %v1266
    %v1520 = vsel %vm1431, %v1456, %v1271
    %v1521 = vsel %vm1431, %v1457, %v1274
    %v1522 = vsel %vm1431, %v1458, %v1279
    %v1523 = vsel %vm1431, %v1459, %v1282
    %v1524 = vsel %vm1431, %v1460, %v1287
    %v1525 = vsel %vm1431, %v1461, %v1290
    %v1526 = vsel %vm1431, %v1462, %v1295
    %v1527 = vsel %vm1431, %v1463, %v1298
    %v1528 = vsel %vm1431, %v1464, %v1303
    %v1529 = vsel %vm1431, %v1465, %v1306
    %v1530 = vsel %vm1431, %v1466, %v1311
    %v1531 = vsel %vm1431, %v1467, %v1314
    %v1532 = vsel %vm1431, %v1468, %v1319
    %v1533 = vsel %vm1431, %v1469, %v1322
    %v1534 = vsel %vm1431, %v1470, %v1327
    %v1535 = vsel %vm1431, %v1471, %v1330
    %v1536 = vsel %vm1431, %v1472, %v1335
    %v1537 = vsel %vm1431, %v1473, %v1338
    %v1538 = vsel %vm1431, %v1474, %v1343
    %v1539 = vsel %vm1431, %v1475, %v1346
    %v1540 = vsel %vm1431, %v1476, %v1351
    %v1541 = vsel %vm1431, %v1477, %v1354
    %v1542 = vsel %vm1431, %v1478, %v1359
    %v1543 = vsel %vm1431, %v1479, %v1362
    %v1544 = vsel %vm1431, %v1480, %v1367
    %v1545 = vsel %vm1431, %v1481, %v1370
    %v1546 = vsel %vm1431, %v1482, %v1375
    %v1547 = vsel %vm1431, %v1483, %v1378
    %v1548 = vsel %vm1431, %v1484, %v1383
    %v1549 = vsel %vm1431, %v1485, %v1386
    %v1550 = vsel %vm1431, %v1486, %v1391
    %v1551 = vsel %vm1431, %v1487, %v1394
    %v1552 = vsel %vm1431, %v1488, %v1399
    %v1553 = vsel %vm1431, %v1489, %v1402
    %v1554 = vsel %vm1431, %v1490, %v1407
    %v1555 = vsel %vm1431, %v1491, %v1410
    %v1556 = vsel %vm1431, %v1492, %v1415
    %v1557 = vsel %vm1431, %v1493, %v1418
    %v1558 = vsel %vm1431, %v1494, %v1423
    %v1559 = vsel %vm1431, %v1495, %v1426
    %v1560 = vtanh.pop %v1496
    %v1561 = vtanh.pop %v1497
    %v1562 = vtanh.pop %v1498
    %v1563 = vtanh.pop %v1499
    %v1564 = vtanh.pop %v1500
    %v1565 = vtanh.pop %v1501
    %v1566 = vtanh.pop %v1502
    %v1567 = vtanh.pop %v1503
    %v1568 = vtanh.pop %v1504
    %v1569 = vtanh.pop %v1505
    %v1570 = vtanh.pop %v1506
    %v1571 = vtanh.pop %v1507
    %v1572 = vtanh.pop %v1508
    %v1573 = vtanh.pop %v1509
    %v1574 = vtanh.pop %v1510
    %v1575 = vtanh.pop %v1511
    %v1576 = vtanh.pop %v1512
    %v1577 = vtanh.pop %v1513
    %v1578 = vtanh.pop %v1514
    %v1579 = vtanh.pop %v1515
    %v1580 = vtanh.pop %v1516
    %v1581 = vtanh.pop %v1517
    %v1582 = vtanh.pop %v1518
    %v1583 = vtanh.pop %v1519
    %v1584 = vtanh.pop %v1520
    %v1585 = vtanh.pop %v1521
    %v1586 = vtanh.pop %v1522
    %v1587 = vtanh.pop %v1523
    %v1588 = vtanh.pop %v1524
    %v1589 = vtanh.pop %v1525
    %v1590 = vtanh.pop %v1526
    %v1591 = vtanh.pop %v1527
    %v1592 = vtanh.pop %v1528
    %v1593 = vtanh.pop %v1529
    %v1594 = vtanh.pop %v1530
    %v1595 = vtanh.pop %v1531
    %v1596 = vtanh.pop %v1532
    %v1597 = vtanh.pop %v1533
    %v1598 = vtanh.pop %v1534
    %v1599 = vtanh.pop %v1535
    %v1600 = vtanh.pop %v1536
    %v1601 = vtanh.pop %v1537
    %v1602 = vtanh.pop %v1538
    %v1603 = vtanh.pop %v1539
    %v1604 = vtanh.pop %v1540
    %v1605 = vtanh.pop %v1541
    %v1606 = vtanh.pop %v1542
    %v1607 = vtanh.pop %v1543
    %v1608 = vtanh.pop %v1544
    %v1609 = vtanh.pop %v1545
    %v1610 = vtanh.pop %v1546
    %v1611 = vtanh.pop %v1547
    %v1612 = vtanh.pop %v1548
    %v1613 = vtanh.pop %v1549
    %v1614 = vtanh.pop %v1550
    %v1615 = vtanh.pop %v1551
    %v1616 = vtanh.pop %v1552
    %v1617 = vtanh.pop %v1553
    %v1618 = vtanh.pop %v1554
    %v1619 = vtanh.pop %v1555
    %v1620 = vtanh.pop %v1556
    %v1621 = vtanh.pop %v1557
    %v1622 = vtanh.pop %v1558
    %v1623 = vtanh.pop %v1559
    %v1624 = vmul.f32 %v1560, 0.5
    %v1625 = vmul.f32 %v1561, 0.5
    %v1626 = vmul.f32 %v1562, 0.5
    %v1627 = vmul.f32 %v1563, 0.5
    %v1628 = vmul.f32 %v1564, 0.5
    %v1629 = vmul.f32 %v1565, 0.5
    %v1630 = vmul.f32 %v1566, 0.5
    %v1631 = vmul.f32 %v1567, 0.5
    %v1632 = vmul.f32 %v1568, 0.5
    %v1633 = vmul.f32 %v1569, 0.5
    %v1634 = vmul.f32 %v1570, 0.5
    %v1635 = vmul.f32 %v1571, 0.5
    %v1636 = vmul.f32 %v1572, 0.5
    %v1637 = vmul.f32 %v1573, 0.5
    %v1638 = vmul.f32 %v1574, 0.5
    %v1639 = vmul.f32 %v1575, 0.5
    %v1640 = vmul.f32 %v1576, 0.5
    %v1641 = vmul.f32 %v1577, 0.5
    %v1642 = vmul.f32 %v1578, 0.5
    %v1643 = vmul.f32 %v1579, 0.5
    %v1644 = vmul.f32 %v1580, 0.5
    %v1645 = vmul.f32 %v1581, 0.5
    %v1646 = vmul.f32 %v1582, 0.5
    %v1647 = vmul.f32 %v1583, 0.5
    %v1648 = vmul.f32 %v1584, 0.5
    %v1649 = vmul.f32 %v1585, 0.5
    %v1650 = vmul.f32 %v1586, 0.5
    %v1651 = vmul.f32 %v1587, 0.5
    %v1652 = vmul.f32 %v1588, 0.5
    %v1653 = vmul.f32 %v1589, 0.5
    %v1654 = vmul.f32 %v1590, 0.5
    %v1655 = vmul.f32 %v1591, 0.5
    %v1656 = vmul.f32 %v1592, 0.5
    %v1657 = vmul.f32 %v1593, 0.5
    %v1658 = vmul.f32 %v1594, 0.5
    %v1659 = vmul.f32 %v1595, 0.5
    %v1660 = vmul.f32 %v1596, 0.5
    %v1661 = vmul.f32 %v1597, 0.5
    %v1662 = vmul.f32 %v1598, 0.5
    %v1663 = vmul.f32 %v1599, 0.5
    %v1664 = vmul.f32 %v1600, 0.5
    %v1665 = vmul.f32 %v1601, 0.5
    %v1666 = vmul.f32 %v1602, 0.5
    %v1667 = vmul.f32 %v1603, 0.5
    %v1668 = vmul.f32 %v1604, 0.5
    %v1669 = vmul.f32 %v1605, 0.5
    %v1670 = vmul.f32 %v1606, 0.5
    %v1671 = vmul.f32 %v1607, 0.5
    %v1672 = vmul.f32 %v1608, 0.5
    %v1673 = vmul.f32 %v1609, 0.5
    %v1674 = vmul.f32 %v1610, 0.5
    %v1675 = vmul.f32 %v1611, 0.5
    %v1676 = vmul.f32 %v1612, 0.5
    %v1677 = vmul.f32 %v1613, 0.5
    %v1678 = vmul.f32 %v1614, 0.5
    %v1679 = vmul.f32 %v1615, 0.5
    %v1680 = vmul.f32 %v1616, 0.5
    %v1681 = vmul.f32 %v1617, 0.5
    %v1682 = vmul.f32 %v1618, 0.5
    %v1683 = vmul.f32 %v1619, 0.5
    %v1684 = vmul.f32 %v1620, 0.5
    %v1685 = vmul.f32 %v1621, 0.5
    %v1686 = vmul.f32 %v1622, 0.5
    %v1687 = vmul.f32 %v1623, 0.5
    %v1688 = vadd.f32 %v1624, 0.5
    %v1689 = vadd.f32 %v1625, 0.5
    %v1690 = vadd.f32 %v1626, 0.5
    %v1691 = vadd.f32 %v1627, 0.5
    %v1692 = vadd.f32 %v1628, 0.5
    %v1693 = vadd.f32 %v1629, 0.5
    %v1694 = vadd.f32 %v1630, 0.5
    %v1695 = vadd.f32 %v1631, 0.5
    %v1696 = vadd.f32 %v1632, 0.5
    %v1697 = vadd.f32 %v1633, 0.5
    %v1698 = vadd.f32 %v1634, 0.5
    %v1699 = vadd.f32 %v1635, 0.5
    %v1700 = vadd.f32 %v1636, 0.5
    %v1701 = vadd.f32 %v1637, 0.5
    %v1702 = vadd.f32 %v1638, 0.5
    %v1703 = vadd.f32 %v1639, 0.5
    %v1704 = vadd.f32 %v1640, 0.5
    %v1705 = vadd.f32 %v1641, 0.5
    %v1706 = vadd.f32 %v1642, 0.5
    %v1707 = vadd.f32 %v1643, 0.5
    %v1708 = vadd.f32 %v1644, 0.5
    %v1709 = vadd.f32 %v1645, 0.5
    %v1710 = vadd.f32 %v1646, 0.5
    %v1711 = vadd.f32 %v1647, 0.5
    %v1712 = vadd.f32 %v1648, 0.5
    %v1713 = vadd.f32 %v1649, 0.5
    %v1714 = vadd.f32 %v1650, 0.5
    %v1715 = vadd.f32 %v1651, 0.5
    %v1716 = vadd.f32 %v1652, 0.5
    %v1717 = vadd.f32 %v1653, 0.5
    %v1718 = vadd.f32 %v1654, 0.5
    %v1719 = vadd.f32 %v1655, 0.5
    %v1720 = vadd.f32 %v1656, 0.5
    %v1721 = vadd.f32 %v1657, 0.5
    %v1722 = vadd.f32 %v1658, 0.5
    %v1723 = vadd.f32 %v1659, 0.5
    %v1724 = vadd.f32 %v1660, 0.5
    %v1725 = vadd.f32 %v1661, 0.5
    %v1726 = vadd.f32 %v1662, 0.5
    %v1727 = vadd.f32 %v1663, 0.5
    %v1728 = vadd.f32 %v1664, 0.5
    %v1729 = vadd.f32 %v1665, 0.5
    %v1730 = vadd.f32 %v1666, 0.5
    %v1731 = vadd.f32 %v1667, 0.5
    %v1732 = vadd.f32 %v1668, 0.5
    %v1733 = vadd.f32 %v1669, 0.5
    %v1734 = vadd.f32 %v1670, 0.5
    %v1735 = vadd.f32 %v1671, 0.5
    %v1736 = vadd.f32 %v1672, 0.5
    %v1737 = vadd.f32 %v1673, 0.5
    %v1738 = vadd.f32 %v1674, 0.5
    %v1739 = vadd.f32 %v1675, 0.5
    %v1740 = vadd.f32 %v1676, 0.5
    %v1741 = vadd.f32 %v1677, 0.5
    %v1742 = vadd.f32 %v1678, 0.5
    %v1743 = vadd.f32 %v1679, 0.5
    %v1744 = vadd.f32 %v1680, 0.5
    %v1745 = vadd.f32 %v1681, 0.5
    %v1746 = vadd.f32 %v1682, 0.5
    %v1747 = vadd.f32 %v1683, 0.5
    %v1748 = vadd.f32 %v1684, 0.5
    %v1749 = vadd.f32 %v1685, 0.5
    %v1750 = vadd.f32 %v1686, 0.5
    %v1751 = vadd.f32 %v1687, 0.5
    %v1752 = vsel %vm1431, %v1688, %v1560
    %v1753 = vsel %vm1431, %v1689, %v1561
    %v1754 = vsel %vm1431, %v1690, %v1562
    %v1755 = vsel %vm1431, %v1691, %v1563
    %v1756 = vsel %vm1431, %v1692, %v1564
    %v1757 = vsel %vm1431, %v1693, %v1565
    %v1758 = vsel %vm1431, %v1694, %v1566
    %v1759 = vsel %vm1431, %v1695, %v1567
    %v1760 = vsel %vm1431, %v1696, %v1568
    %v1761 = vsel %vm1431, %v1697, %v1569
    %v1762 = vsel %vm1431, %v1698, %v1570
    %v1763 = vsel %vm1431, %v1699, %v1571
    %v1764 = vsel %vm1431, %v1700, %v1572
    %v1765 = vsel %vm1431, %v1701, %v1573
    %v1766 = vsel %vm1431, %v1702, %v1574
    %v1767 = vsel %vm1431, %v1703, %v1575
    %v1768 = vsel %vm1431, %v1704, %v1576
    %v1769 = vsel %vm1431, %v1705, %v1577
    %v1770 = vsel %vm1431, %v1706, %v1578
    %v1771 = vsel %vm1431, %v1707, %v1579
    %v1772 = vsel %vm1431, %v1708, %v1580
    %v1773 = vsel %vm1431, %v1709, %v1581
    %v1774 = vsel %vm1431, %v1710, %v1582
    %v1775 = vsel %vm1431, %v1711, %v1583
    %v1776 = vsel %vm1431, %v1712, %v1584
    %v1777 = vsel %vm1431, %v1713, %v1585
    %v1778 = vsel %vm1431, %v1714, %v1586
    %v1779 = vsel %vm1431, %v1715, %v1587
    %v1780 = vsel %vm1431, %v1716, %v1588
    %v1781 = vsel %vm1431, %v1717, %v1589
    %v1782 = vsel %vm1431, %v1718, %v1590
    %v1783 = vsel %vm1431, %v1719, %v1591
    %v1784 = vsel %vm1431, %v1720, %v1592
    %v1785 = vsel %vm1431, %v1721, %v1593
    %v1786 = vsel %vm1431, %v1722, %v1594
    %v1787 = vsel %vm1431, %v1723, %v1595
    %v1788 = vsel %vm1431, %v1724, %v1596
    %v1789 = vsel %vm1431, %v1725, %v1597
    %v1790 = vsel %vm1431, %v1726, %v1598
    %v1791 = vsel %vm1431, %v1727, %v1599
    %v1792 = vsel %vm1431, %v1728, %v1600
    %v1793 = vsel %vm1431, %v1729, %v1601
    %v1794 = vsel %vm1431, %v1730, %v1602
    %v1795 = vsel %vm1431, %v1731, %v1603
    %v1796 = vsel %vm1431, %v1732, %v1604
    %v1797 = vsel %vm1431, %v1733, %v1605
    %v1798 = vsel %vm1431, %v1734, %v1606
    %v1799 = vsel %vm1431, %v1735, %v1607
    %v1800 = vsel %vm1431, %v1736, %v1608
    %v1801 = vsel %vm1431, %v1737, %v1609
    %v1802 = vsel %vm1431, %v1738, %v1610
    %v1803 = vsel %vm1431, %v1739, %v1611
    %v1804 = vsel %vm1431, %v1740, %v1612
    %v1805 = vsel %vm1431, %v1741, %v1613
    %v1806 = vsel %vm1431, %v1742, %v1614
    %v1807 = vsel %vm1431, %v1743, %v1615
    %v1808 = vsel %vm1431, %v1744, %v1616
    %v1809 = vsel %vm1431, %v1745, %v1617
    %v1810 = vsel %vm1431, %v1746, %v1618
    %v1811 = vsel %vm1431, %v1747, %v1619
    %v1812 = vsel %vm1431, %v1748, %v1620
    %v1813 = vsel %vm1431, %v1749, %v1621
    %v1814 = vsel %vm1431, %v1750, %v1622
    %v1815 = vsel %vm1431, %v1751, %v1623
    %v1816 = vld [vmem:[%s2] sm:$0xff]
    %v1817 = vld [vmem:[%s2 + $0x8] sm:$0xff]
    %v1818 = vld [vmem:[%s2 + $0x10] sm:$0xff]
    %v1819 = vld [vmem:[%s2 + $0x18] sm:$0xff]
    %v1820 = vld [vmem:[%s2 + $0x20] sm:$0xff]
    %v1821 = vld [vmem:[%s2 + $0x28] sm:$0xff]
    %v1822 = vld [vmem:[%s2 + $0x30] sm:$0xff]
    %v1823 = vld [vmem:[%s2 + $0x38] sm:$0xff]
    %v1824 = vld [vmem:[%s2 + $0x40] sm:$0xff]
    %v1825 = vld [vmem:[%s2 + $0x48] sm:$0xff]
    %v1826 = vld [vmem:[%s2 + $0x50] sm:$0xff]
    %v1827 = vld [vmem:[%s2 + $0x58] sm:$0xff]
    %v1828 = vld [vmem:[%s2 + $0x60] sm:$0xff]
    %v1829 = vld [vmem:[%s2 + $0x68] sm:$0xff]
    %v1830 = vld [vmem:[%s2 + $0x70] sm:$0xff]
    %v1831 = vld [vmem:[%s2 + $0x78] sm:$0xff]
    %v1832 = vld [vmem:[%s2 + $0x80] sm:$0xff]
    %v1833 = vld [vmem:[%s2 + $0x88] sm:$0xff]
    %v1834 = vld [vmem:[%s2 + $0x90] sm:$0xff]
    %v1835 = vld [vmem:[%s2 + $0x98] sm:$0xff]
    %v1836 = vld [vmem:[%s2 + $0xa0] sm:$0xff]
    %v1837 = vld [vmem:[%s2 + $0xa8] sm:$0xff]
    %v1838 = vld [vmem:[%s2 + $0xb0] sm:$0xff]
    %v1839 = vld [vmem:[%s2 + $0xb8] sm:$0xff]
    %v1840 = vld [vmem:[%s2 + $0xc0] sm:$0xff]
    %v1841 = vld [vmem:[%s2 + $0xc8] sm:$0xff]
    %v1842 = vld [vmem:[%s2 + $0xd0] sm:$0xff]
    %v1843 = vld [vmem:[%s2 + $0xd8] sm:$0xff]
    %v1844 = vld [vmem:[%s2 + $0xe0] sm:$0xff]
    %v1845 = vld [vmem:[%s2 + $0xe8] sm:$0xff]
    %v1846 = vld [vmem:[%s2 + $0xf0] sm:$0xff]
    %v1847 = vld [vmem:[%s2 + $0xf8] sm:$0xff]
    %v1848 = vld [vmem:[%s2 + $0x100] sm:$0xff]
    %v1849 = vld [vmem:[%s2 + $0x108] sm:$0xff]
    %v1850 = vld [vmem:[%s2 + $0x110] sm:$0xff]
    %v1851 = vld [vmem:[%s2 + $0x118] sm:$0xff]
    %v1852 = vld [vmem:[%s2 + $0x120] sm:$0xff]
    %v1853 = vld [vmem:[%s2 + $0x128] sm:$0xff]
    %v1854 = vld [vmem:[%s2 + $0x130] sm:$0xff]
    %v1855 = vld [vmem:[%s2 + $0x138] sm:$0xff]
    %v1856 = vld [vmem:[%s2 + $0x140] sm:$0xff]
    %v1857 = vld [vmem:[%s2 + $0x148] sm:$0xff]
    %v1858 = vld [vmem:[%s2 + $0x150] sm:$0xff]
    %v1859 = vld [vmem:[%s2 + $0x158] sm:$0xff]
    %v1860 = vld [vmem:[%s2 + $0x160] sm:$0xff]
    %v1861 = vld [vmem:[%s2 + $0x168] sm:$0xff]
    %v1862 = vld [vmem:[%s2 + $0x170] sm:$0xff]
    %v1863 = vld [vmem:[%s2 + $0x178] sm:$0xff]
    %v1864 = vld [vmem:[%s2 + $0x180] sm:$0xff]
    %v1865 = vld [vmem:[%s2 + $0x188] sm:$0xff]
    %v1866 = vld [vmem:[%s2 + $0x190] sm:$0xff]
    %v1867 = vld [vmem:[%s2 + $0x198] sm:$0xff]
    %v1868 = vld [vmem:[%s2 + $0x1a0] sm:$0xff]
    %v1869 = vld [vmem:[%s2 + $0x1a8] sm:$0xff]
    %v1870 = vld [vmem:[%s2 + $0x1b0] sm:$0xff]
    %v1871 = vld [vmem:[%s2 + $0x1b8] sm:$0xff]
    %v1872 = vld [vmem:[%s2 + $0x1c0] sm:$0xff]
    %v1873 = vld [vmem:[%s2 + $0x1c8] sm:$0xff]
    %v1874 = vld [vmem:[%s2 + $0x1d0] sm:$0xff]
    %v1875 = vld [vmem:[%s2 + $0x1d8] sm:$0xff]
    %v1876 = vld [vmem:[%s2 + $0x1e0] sm:$0xff]
    %v1877 = vld [vmem:[%s2 + $0x1e8] sm:$0xff]
    %v1878 = vld [vmem:[%s2 + $0x1f0] sm:$0xff]
    %v1879 = vld [vmem:[%s2 + $0x1f8] sm:$0xff]
    %1944 = vrot.lane.b32.xlu0 %v1816, 32
    %v1945 = vpop.permute.xlu0 %1944
    %1946 = vrot.lane.b32.xlu0 %v1817, 32
    %v1947 = vpop.permute.xlu0 %1946
    %1948 = vrot.lane.b32.xlu0 %v1818, 32
    %v1949 = vpop.permute.xlu0 %1948
    %1950 = vrot.lane.b32.xlu0 %v1819, 32
    %v1951 = vpop.permute.xlu0 %1950
    %1952 = vrot.lane.b32.xlu0 %v1820, 32
    %v1953 = vpop.permute.xlu0 %1952
    %1954 = vrot.lane.b32.xlu0 %v1821, 32
    %v1955 = vpop.permute.xlu0 %1954
    %1956 = vrot.lane.b32.xlu0 %v1822, 32
    %v1957 = vpop.permute.xlu0 %1956
    %1958 = vrot.lane.b32.xlu0 %v1823, 32
    %v1959 = vpop.permute.xlu0 %1958
    %1960 = vrot.lane.b32.xlu0 %v1824, 32
    %v1961 = vpop.permute.xlu0 %1960
    %1962 = vrot.lane.b32.xlu0 %v1825, 32
    %v1963 = vpop.permute.xlu0 %1962
    %1964 = vrot.lane.b32.xlu0 %v1826, 32
    %v1965 = vpop.permute.xlu0 %1964
    %1966 = vrot.lane.b32.xlu0 %v1827, 32
    %v1967 = vpop.permute.xlu0 %1966
    %1968 = vrot.lane.b32.xlu0 %v1828, 32
    %v1969 = vpop.permute.xlu0 %1968
    %1970 = vrot.lane.b32.xlu0 %v1829, 32
    %v1971 = vpop.permute.xlu0 %1970
    %1972 = vrot.lane.b32.xlu0 %v1830, 32
    %v1973 = vpop.permute.xlu0 %1972
    %1974 = vrot.lane.b32.xlu0 %v1831, 32
    %v1975 = vpop.permute.xlu0 %1974
    %1976 = vrot.lane.b32.xlu0 %v1832, 32
    %v1977 = vpop.permute.xlu0 %1976
    %1978 = vrot.lane.b32.xlu0 %v1833, 32
    %v1979 = vpop.permute.xlu0 %1978
    %1980 = vrot.lane.b32.xlu0 %v1834, 32
    %v1981 = vpop.permute.xlu0 %1980
    %1982 = vrot.lane.b32.xlu0 %v1835, 32
    %v1983 = vpop.permute.xlu0 %1982
    %1984 = vrot.lane.b32.xlu0 %v1836, 32
    %v1985 = vpop.permute.xlu0 %1984
    %1986 = vrot.lane.b32.xlu0 %v1837, 32
    %v1987 = vpop.permute.xlu0 %1986
    %1988 = vrot.lane.b32.xlu0 %v1838, 32
    %v1989 = vpop.permute.xlu0 %1988
    %1990 = vrot.lane.b32.xlu0 %v1839, 32
    %v1991 = vpop.permute.xlu0 %1990
    %1992 = vrot.lane.b32.xlu0 %v1840, 32
    %v1993 = vpop.permute.xlu0 %1992
    %1994 = vrot.lane.b32.xlu0 %v1841, 32
    %v1995 = vpop.permute.xlu0 %1994
    %1996 = vrot.lane.b32.xlu0 %v1842, 32
    %v1997 = vpop.permute.xlu0 %1996
    %1998 = vrot.lane.b32.xlu0 %v1843, 32
    %v1999 = vpop.permute.xlu0 %1998
    %2000 = vrot.lane.b32.xlu0 %v1844, 32
    %v2001 = vpop.permute.xlu0 %2000
    %2002 = vrot.lane.b32.xlu0 %v1845, 32
    %v2003 = vpop.permute.xlu0 %2002
    %2004 = vrot.lane.b32.xlu0 %v1846, 32
    %v2005 = vpop.permute.xlu0 %2004
    %2006 = vrot.lane.b32.xlu0 %v1847, 32
    %v2007 = vpop.permute.xlu0 %2006
    %2008 = vrot.lane.b32.xlu0 %v1848, 32
    %v2009 = vpop.permute.xlu0 %2008
    %2010 = vrot.lane.b32.xlu0 %v1849, 32
    %v2011 = vpop.permute.xlu0 %2010
    %2012 = vrot.lane.b32.xlu0 %v1850, 32
    %v2013 = vpop.permute.xlu0 %2012
    %2014 = vrot.lane.b32.xlu0 %v1851, 32
    %v2015 = vpop.permute.xlu0 %2014
    %2016 = vrot.lane.b32.xlu0 %v1852, 32
    %v2017 = vpop.permute.xlu0 %2016
    %2018 = vrot.lane.b32.xlu0 %v1853, 32
    %v2019 = vpop.permute.xlu0 %2018
    %2020 = vrot.lane.b32.xlu0 %v1854, 32
    %v2021 = vpop.permute.xlu0 %2020
    %2022 = vrot.lane.b32.xlu0 %v1855, 32
    %v2023 = vpop.permute.xlu0 %2022
    %2024 = vrot.lane.b32.xlu0 %v1856, 32
    %v2025 = vpop.permute.xlu0 %2024
    %2026 = vrot.lane.b32.xlu0 %v1857, 32
    %v2027 = vpop.permute.xlu0 %2026
    %2028 = vrot.lane.b32.xlu0 %v1858, 32
    %v2029 = vpop.permute.xlu0 %2028
    %2030 = vrot.lane.b32.xlu0 %v1859, 32
    %v2031 = vpop.permute.xlu0 %2030
    %2032 = vrot.lane.b32.xlu0 %v1860, 32
    %v2033 = vpop.permute.xlu0 %2032
    %2034 = vrot.lane.b32.xlu0 %v1861, 32
    %v2035 = vpop.permute.xlu0 %2034
    %2036 = vrot.lane.b32.xlu0 %v1862, 32
    %v2037 = vpop.permute.xlu0 %2036
    %2038 = vrot.lane.b32.xlu0 %v1863, 32
    %v2039 = vpop.permute.xlu0 %2038
    %2040 = vrot.lane.b32.xlu0 %v1864, 32
    %v2041 = vpop.permute.xlu0 %2040
    %2042 = vrot.lane.b32.xlu0 %v1865, 32
    %v2043 = vpop.permute.xlu0 %2042
    %2044 = vrot.lane.b32.xlu0 %v1866, 32
    %v2045 = vpop.permute.xlu0 %2044
    %2046 = vrot.lane.b32.xlu0 %v1867, 32
    %v2047 = vpop.permute.xlu0 %2046
    %2048 = vrot.lane.b32.xlu0 %v1868, 32
    %v2049 = vpop.permute.xlu0 %2048
    %2050 = vrot.lane.b32.xlu0 %v1869, 32
    %v2051 = vpop.permute.xlu0 %2050
    %2052 = vrot.lane.b32.xlu0 %v1870, 32
    %v2053 = vpop.permute.xlu0 %2052
    %2054 = vrot.lane.b32.xlu0 %v1871, 32
    %v2055 = vpop.permute.xlu0 %2054
    %2056 = vrot.lane.b32.xlu0 %v1872, 32
    %v2057 = vpop.permute.xlu0 %2056
    %2058 = vrot.lane.b32.xlu0 %v1873, 32
    %v2059 = vpop.permute.xlu0 %2058
    %2060 = vrot.lane.b32.xlu0 %v1874, 32
    %v2061 = vpop.permute.xlu0 %2060
    %2062 = vrot.lane.b32.xlu0 %v1875, 32
    %v2063 = vpop.permute.xlu0 %2062
    %2064 = vrot.lane.b32.xlu0 %v1876, 32
    %v2065 = vpop.permute.xlu0 %2064
    %2066 = vrot.lane.b32.xlu0 %v1877, 32
    %v2067 = vpop.permute.xlu0 %2066
    %2068 = vrot.lane.b32.xlu0 %v1878, 32
    %v2069 = vpop.permute.xlu0 %2068
    %2070 = vrot.lane.b32.xlu0 %v1879, 32
    %v2071 = vpop.permute.xlu0 %2070
    %v2136 = vmul.f32 %v1752, %v1945
    %v2137 = vmul.f32 %v1753, %v1947
    %v2138 = vmul.f32 %v1754, %v1949
    %v2139 = vmul.f32 %v1755, %v1951
    %v2140 = vmul.f32 %v1756, %v1953
    %v2141 = vmul.f32 %v1757, %v1955
    %v2142 = vmul.f32 %v1758, %v1957
    %v2143 = vmul.f32 %v1759, %v1959
    %v2144 = vmul.f32 %v1760, %v1961
    %v2145 = vmul.f32 %v1761, %v1963
    %v2146 = vmul.f32 %v1762, %v1965
    %v2147 = vmul.f32 %v1763, %v1967
    %v2148 = vmul.f32 %v1764, %v1969
    %v2149 = vmul.f32 %v1765, %v1971
    %v2150 = vmul.f32 %v1766, %v1973
    %v2151 = vmul.f32 %v1767, %v1975
    %v2152 = vmul.f32 %v1768, %v1977
    %v2153 = vmul.f32 %v1769, %v1979
    %v2154 = vmul.f32 %v1770, %v1981
    %v2155 = vmul.f32 %v1771, %v1983
    %v2156 = vmul.f32 %v1772, %v1985
    %v2157 = vmul.f32 %v1773, %v1987
    %v2158 = vmul.f32 %v1774, %v1989
    %v2159 = vmul.f32 %v1775, %v1991
    %v2160 = vmul.f32 %v1776, %v1993
    %v2161 = vmul.f32 %v1777, %v1995
    %v2162 = vmul.f32 %v1778, %v1997
    %v2163 = vmul.f32 %v1779, %v1999
    %v2164 = vmul.f32 %v1780, %v2001
    %v2165 = vmul.f32 %v1781, %v2003
    %v2166 = vmul.f32 %v1782, %v2005
    %v2167 = vmul.f32 %v1783, %v2007
    %v2168 = vmul.f32 %v1784, %v2009
    %v2169 = vmul.f32 %v1785, %v2011
    %v2170 = vmul.f32 %v1786, %v2013
    %v2171 = vmul.f32 %v1787, %v2015
    %v2172 = vmul.f32 %v1788, %v2017
    %v2173 = vmul.f32 %v1789, %v2019
    %v2174 = vmul.f32 %v1790, %v2021
    %v2175 = vmul.f32 %v1791, %v2023
    %v2176 = vmul.f32 %v1792, %v2025
    %v2177 = vmul.f32 %v1793, %v2027
    %v2178 = vmul.f32 %v1794, %v2029
    %v2179 = vmul.f32 %v1795, %v2031
    %v2180 = vmul.f32 %v1796, %v2033
    %v2181 = vmul.f32 %v1797, %v2035
    %v2182 = vmul.f32 %v1798, %v2037
    %v2183 = vmul.f32 %v1799, %v2039
    %v2184 = vmul.f32 %v1800, %v2041
    %v2185 = vmul.f32 %v1801, %v2043
    %v2186 = vmul.f32 %v1802, %v2045
    %v2187 = vmul.f32 %v1803, %v2047
    %v2188 = vmul.f32 %v1804, %v2049
    %v2189 = vmul.f32 %v1805, %v2051
    %v2190 = vmul.f32 %v1806, %v2053
    %v2191 = vmul.f32 %v1807, %v2055
    %v2192 = vmul.f32 %v1808, %v2057
    %v2193 = vmul.f32 %v1809, %v2059
    %v2194 = vmul.f32 %v1810, %v2061
    %v2195 = vmul.f32 %v1811, %v2063
    %v2196 = vmul.f32 %v1812, %v2065
    %v2197 = vmul.f32 %v1813, %v2067
    %v2198 = vmul.f32 %v1814, %v2069
    %v2199 = vmul.f32 %v1815, %v2071
    %2264 = vrot.lane.b32.xlu0 %v1752, 32
    %v2265 = vpop.permute.xlu0 %2264
    %2266 = vrot.lane.b32.xlu0 %v1753, 32
    %v2267 = vpop.permute.xlu0 %2266
    %2268 = vrot.lane.b32.xlu0 %v1754, 32
    %v2269 = vpop.permute.xlu0 %2268
    %2270 = vrot.lane.b32.xlu0 %v1755, 32
    %v2271 = vpop.permute.xlu0 %2270
    %2272 = vrot.lane.b32.xlu0 %v1756, 32
    %v2273 = vpop.permute.xlu0 %2272
    %2274 = vrot.lane.b32.xlu0 %v1757, 32
    %v2275 = vpop.permute.xlu0 %2274
    %2276 = vrot.lane.b32.xlu0 %v1758, 32
    %v2277 = vpop.permute.xlu0 %2276
    %2278 = vrot.lane.b32.xlu0 %v1759, 32
    %v2279 = vpop.permute.xlu0 %2278
    %2280 = vrot.lane.b32.xlu0 %v1760, 32
    %v2281 = vpop.permute.xlu0 %2280
    %2282 = vrot.lane.b32.xlu0 %v1761, 32
    %v2283 = vpop.permute.xlu0 %2282
    %2284 = vrot.lane.b32.xlu0 %v1762, 32
    %v2285 = vpop.permute.xlu0 %2284
    %2286 = vrot.lane.b32.xlu0 %v1763, 32
    %v2287 = vpop.permute.xlu0 %2286
    %2288 = vrot.lane.b32.xlu0 %v1764, 32
    %v2289 = vpop.permute.xlu0 %2288
    %2290 = vrot.lane.b32.xlu0 %v1765, 32
    %v2291 = vpop.permute.xlu0 %2290
    %2292 = vrot.lane.b32.xlu0 %v1766, 32
    %v2293 = vpop.permute.xlu0 %2292
    %2294 = vrot.lane.b32.xlu0 %v1767, 32
    %v2295 = vpop.permute.xlu0 %2294
    %2296 = vrot.lane.b32.xlu0 %v1768, 32
    %v2297 = vpop.permute.xlu0 %2296
    %2298 = vrot.lane.b32.xlu0 %v1769, 32
    %v2299 = vpop.permute.xlu0 %2298
    %2300 = vrot.lane.b32.xlu0 %v1770, 32
    %v2301 = vpop.permute.xlu0 %2300
    %2302 = vrot.lane.b32.xlu0 %v1771, 32
    %v2303 = vpop.permute.xlu0 %2302
    %2304 = vrot.lane.b32.xlu0 %v1772, 32
    %v2305 = vpop.permute.xlu0 %2304
    %2306 = vrot.lane.b32.xlu0 %v1773, 32
    %v2307 = vpop.permute.xlu0 %2306
    %2308 = vrot.lane.b32.xlu0 %v1774, 32
    %v2309 = vpop.permute.xlu0 %2308
    %2310 = vrot.lane.b32.xlu0 %v1775, 32
    %v2311 = vpop.permute.xlu0 %2310
    %2312 = vrot.lane.b32.xlu0 %v1776, 32
    %v2313 = vpop.permute.xlu0 %2312
    %2314 = vrot.lane.b32.xlu0 %v1777, 32
    %v2315 = vpop.permute.xlu0 %2314
    %2316 = vrot.lane.b32.xlu0 %v1778, 32
    %v2317 = vpop.permute.xlu0 %2316
    %2318 = vrot.lane.b32.xlu0 %v1779, 32
    %v2319 = vpop.permute.xlu0 %2318
    %2320 = vrot.lane.b32.xlu0 %v1780, 32
    %v2321 = vpop.permute.xlu0 %2320
    %2322 = vrot.lane.b32.xlu0 %v1781, 32
    %v2323 = vpop.permute.xlu0 %2322
    %2324 = vrot.lane.b32.xlu0 %v1782, 32
    %v2325 = vpop.permute.xlu0 %2324
    %2326 = vrot.lane.b32.xlu0 %v1783, 32
    %v2327 = vpop.permute.xlu0 %2326
    %2328 = vrot.lane.b32.xlu0 %v1784, 32
    %v2329 = vpop.permute.xlu0 %2328
    %2330 = vrot.lane.b32.xlu0 %v1785, 32
    %v2331 = vpop.permute.xlu0 %2330
    %2332 = vrot.lane.b32.xlu0 %v1786, 32
    %v2333 = vpop.permute.xlu0 %2332
    %2334 = vrot.lane.b32.xlu0 %v1787, 32
    %v2335 = vpop.permute.xlu0 %2334
    %2336 = vrot.lane.b32.xlu0 %v1788, 32
    %v2337 = vpop.permute.xlu0 %2336
    %2338 = vrot.lane.b32.xlu0 %v1789, 32
    %v2339 = vpop.permute.xlu0 %2338
    %2340 = vrot.lane.b32.xlu0 %v1790, 32
    %v2341 = vpop.permute.xlu0 %2340
    %2342 = vrot.lane.b32.xlu0 %v1791, 32
    %v2343 = vpop.permute.xlu0 %2342
    %2344 = vrot.lane.b32.xlu0 %v1792, 32
    %v2345 = vpop.permute.xlu0 %2344
    %2346 = vrot.lane.b32.xlu0 %v1793, 32
    %v2347 = vpop.permute.xlu0 %2346
    %2348 = vrot.lane.b32.xlu0 %v1794, 32
    %v2349 = vpop.permute.xlu0 %2348
    %2350 = vrot.lane.b32.xlu0 %v1795, 32
    %v2351 = vpop.permute.xlu0 %2350
    %2352 = vrot.lane.b32.xlu0 %v1796, 32
    %v2353 = vpop.permute.xlu0 %2352
    %2354 = vrot.lane.b32.xlu0 %v1797, 32
    %v2355 = vpop.permute.xlu0 %2354
    %2356 = vrot.lane.b32.xlu0 %v1798, 32
    %v2357 = vpop.permute.xlu0 %2356
    %2358 = vrot.lane.b32.xlu0 %v1799, 32
    %v2359 = vpop.permute.xlu0 %2358
    %2360 = vrot.lane.b32.xlu0 %v1800, 32
    %v2361 = vpop.permute.xlu0 %2360
    %2362 = vrot.lane.b32.xlu0 %v1801, 32
    %v2363 = vpop.permute.xlu0 %2362
    %2364 = vrot.lane.b32.xlu0 %v1802, 32
    %v2365 = vpop.permute.xlu0 %2364
    %2366 = vrot.lane.b32.xlu0 %v1803, 32
    %v2367 = vpop.permute.xlu0 %2366
    %2368 = vrot.lane.b32.xlu0 %v1804, 32
    %v2369 = vpop.permute.xlu0 %2368
    %2370 = vrot.lane.b32.xlu0 %v1805, 32
    %v2371 = vpop.permute.xlu0 %2370
    %2372 = vrot.lane.b32.xlu0 %v1806, 32
    %v2373 = vpop.permute.xlu0 %2372
    %2374 = vrot.lane.b32.xlu0 %v1807, 32
    %v2375 = vpop.permute.xlu0 %2374
    %2376 = vrot.lane.b32.xlu0 %v1808, 32
    %v2377 = vpop.permute.xlu0 %2376
    %2378 = vrot.lane.b32.xlu0 %v1809, 32
    %v2379 = vpop.permute.xlu0 %2378
    %2380 = vrot.lane.b32.xlu0 %v1810, 32
    %v2381 = vpop.permute.xlu0 %2380
    %2382 = vrot.lane.b32.xlu0 %v1811, 32
    %v2383 = vpop.permute.xlu0 %2382
    %2384 = vrot.lane.b32.xlu0 %v1812, 32
    %v2385 = vpop.permute.xlu0 %2384
    %2386 = vrot.lane.b32.xlu0 %v1813, 32
    %v2387 = vpop.permute.xlu0 %2386
    %2388 = vrot.lane.b32.xlu0 %v1814, 32
    %v2389 = vpop.permute.xlu0 %2388
    %2390 = vrot.lane.b32.xlu0 %v1815, 32
    %v2391 = vpop.permute.xlu0 %2390
    %v2456 = vmul.f32 %v1752, %v2265
    %v2457 = vmul.f32 %v1753, %v2267
    %v2458 = vmul.f32 %v1754, %v2269
    %v2459 = vmul.f32 %v1755, %v2271
    %v2460 = vmul.f32 %v1756, %v2273
    %v2461 = vmul.f32 %v1757, %v2275
    %v2462 = vmul.f32 %v1758, %v2277
    %v2463 = vmul.f32 %v1759, %v2279
    %v2464 = vmul.f32 %v1760, %v2281
    %v2465 = vmul.f32 %v1761, %v2283
    %v2466 = vmul.f32 %v1762, %v2285
    %v2467 = vmul.f32 %v1763, %v2287
    %v2468 = vmul.f32 %v1764, %v2289
    %v2469 = vmul.f32 %v1765, %v2291
    %v2470 = vmul.f32 %v1766, %v2293
    %v2471 = vmul.f32 %v1767, %v2295
    %v2472 = vmul.f32 %v1768, %v2297
    %v2473 = vmul.f32 %v1769, %v2299
    %v2474 = vmul.f32 %v1770, %v2301
    %v2475 = vmul.f32 %v1771, %v2303
    %v2476 = vmul.f32 %v1772, %v2305
    %v2477 = vmul.f32 %v1773, %v2307
    %v2478 = vmul.f32 %v1774, %v2309
    %v2479 = vmul.f32 %v1775, %v2311
    %v2480 = vmul.f32 %v1776, %v2313
    %v2481 = vmul.f32 %v1777, %v2315
    %v2482 = vmul.f32 %v1778, %v2317
    %v2483 = vmul.f32 %v1779, %v2319
    %v2484 = vmul.f32 %v1780, %v2321
    %v2485 = vmul.f32 %v1781, %v2323
    %v2486 = vmul.f32 %v1782, %v2325
    %v2487 = vmul.f32 %v1783, %v2327
    %v2488 = vmul.f32 %v1784, %v2329
    %v2489 = vmul.f32 %v1785, %v2331
    %v2490 = vmul.f32 %v1786, %v2333
    %v2491 = vmul.f32 %v1787, %v2335
    %v2492 = vmul.f32 %v1788, %v2337
    %v2493 = vmul.f32 %v1789, %v2339
    %v2494 = vmul.f32 %v1790, %v2341
    %v2495 = vmul.f32 %v1791, %v2343
    %v2496 = vmul.f32 %v1792, %v2345
    %v2497 = vmul.f32 %v1793, %v2347
    %v2498 = vmul.f32 %v1794, %v2349
    %v2499 = vmul.f32 %v1795, %v2351
    %v2500 = vmul.f32 %v1796, %v2353
    %v2501 = vmul.f32 %v1797, %v2355
    %v2502 = vmul.f32 %v1798, %v2357
    %v2503 = vmul.f32 %v1799, %v2359
    %v2504 = vmul.f32 %v1800, %v2361
    %v2505 = vmul.f32 %v1801, %v2363
    %v2506 = vmul.f32 %v1802, %v2365
    %v2507 = vmul.f32 %v1803, %v2367
    %v2508 = vmul.f32 %v1804, %v2369
    %v2509 = vmul.f32 %v1805, %v2371
    %v2510 = vmul.f32 %v1806, %v2373
    %v2511 = vmul.f32 %v1807, %v2375
    %v2512 = vmul.f32 %v1808, %v2377
    %v2513 = vmul.f32 %v1809, %v2379
    %v2514 = vmul.f32 %v1810, %v2381
    %v2515 = vmul.f32 %v1811, %v2383
    %v2516 = vmul.f32 %v1812, %v2385
    %v2517 = vmul.f32 %v1813, %v2387
    %v2518 = vmul.f32 %v1814, %v2389
    %v2519 = vmul.f32 %v1815, %v2391
    %2584 = vrot.lane.b32.xlu0 %v2456, 32
    %v2585 = vpop.permute.xlu0 %2584
    %2586 = vrot.lane.b32.xlu0 %v2457, 32
    %v2587 = vpop.permute.xlu0 %2586
    %2588 = vrot.lane.b32.xlu0 %v2458, 32
    %v2589 = vpop.permute.xlu0 %2588
    %2590 = vrot.lane.b32.xlu0 %v2459, 32
    %v2591 = vpop.permute.xlu0 %2590
    %2592 = vrot.lane.b32.xlu0 %v2460, 32
    %v2593 = vpop.permute.xlu0 %2592
    %2594 = vrot.lane.b32.xlu0 %v2461, 32
    %v2595 = vpop.permute.xlu0 %2594
    %2596 = vrot.lane.b32.xlu0 %v2462, 32
    %v2597 = vpop.permute.xlu0 %2596
    %2598 = vrot.lane.b32.xlu0 %v2463, 32
    %v2599 = vpop.permute.xlu0 %2598
    %2600 = vrot.lane.b32.xlu0 %v2464, 32
    %v2601 = vpop.permute.xlu0 %2600
    %2602 = vrot.lane.b32.xlu0 %v2465, 32
    %v2603 = vpop.permute.xlu0 %2602
    %2604 = vrot.lane.b32.xlu0 %v2466, 32
    %v2605 = vpop.permute.xlu0 %2604
    %2606 = vrot.lane.b32.xlu0 %v2467, 32
    %v2607 = vpop.permute.xlu0 %2606
    %2608 = vrot.lane.b32.xlu0 %v2468, 32
    %v2609 = vpop.permute.xlu0 %2608
    %2610 = vrot.lane.b32.xlu0 %v2469, 32
    %v2611 = vpop.permute.xlu0 %2610
    %2612 = vrot.lane.b32.xlu0 %v2470, 32
    %v2613 = vpop.permute.xlu0 %2612
    %2614 = vrot.lane.b32.xlu0 %v2471, 32
    %v2615 = vpop.permute.xlu0 %2614
    %2616 = vrot.lane.b32.xlu0 %v2472, 32
    %v2617 = vpop.permute.xlu0 %2616
    %2618 = vrot.lane.b32.xlu0 %v2473, 32
    %v2619 = vpop.permute.xlu0 %2618
    %2620 = vrot.lane.b32.xlu0 %v2474, 32
    %v2621 = vpop.permute.xlu0 %2620
    %2622 = vrot.lane.b32.xlu0 %v2475, 32
    %v2623 = vpop.permute.xlu0 %2622
    %2624 = vrot.lane.b32.xlu0 %v2476, 32
    %v2625 = vpop.permute.xlu0 %2624
    %2626 = vrot.lane.b32.xlu0 %v2477, 32
    %v2627 = vpop.permute.xlu0 %2626
    %2628 = vrot.lane.b32.xlu0 %v2478, 32
    %v2629 = vpop.permute.xlu0 %2628
    %2630 = vrot.lane.b32.xlu0 %v2479, 32
    %v2631 = vpop.permute.xlu0 %2630
    %2632 = vrot.lane.b32.xlu0 %v2480, 32
    %v2633 = vpop.permute.xlu0 %2632
    %2634 = vrot.lane.b32.xlu0 %v2481, 32
    %v2635 = vpop.permute.xlu0 %2634
    %2636 = vrot.lane.b32.xlu0 %v2482, 32
    %v2637 = vpop.permute.xlu0 %2636
    %2638 = vrot.lane.b32.xlu0 %v2483, 32
    %v2639 = vpop.permute.xlu0 %2638
    %2640 = vrot.lane.b32.xlu0 %v2484, 32
    %v2641 = vpop.permute.xlu0 %2640
    %2642 = vrot.lane.b32.xlu0 %v2485, 32
    %v2643 = vpop.permute.xlu0 %2642
    %2644 = vrot.lane.b32.xlu0 %v2486, 32
    %v2645 = vpop.permute.xlu0 %2644
    %2646 = vrot.lane.b32.xlu0 %v2487, 32
    %v2647 = vpop.permute.xlu0 %2646
    %2648 = vrot.lane.b32.xlu0 %v2488, 32
    %v2649 = vpop.permute.xlu0 %2648
    %2650 = vrot.lane.b32.xlu0 %v2489, 32
    %v2651 = vpop.permute.xlu0 %2650
    %2652 = vrot.lane.b32.xlu0 %v2490, 32
    %v2653 = vpop.permute.xlu0 %2652
    %2654 = vrot.lane.b32.xlu0 %v2491, 32
    %v2655 = vpop.permute.xlu0 %2654
    %2656 = vrot.lane.b32.xlu0 %v2492, 32
    %v2657 = vpop.permute.xlu0 %2656
    %2658 = vrot.lane.b32.xlu0 %v2493, 32
    %v2659 = vpop.permute.xlu0 %2658
    %2660 = vrot.lane.b32.xlu0 %v2494, 32
    %v2661 = vpop.permute.xlu0 %2660
    %2662 = vrot.lane.b32.xlu0 %v2495, 32
    %v2663 = vpop.permute.xlu0 %2662
    %2664 = vrot.lane.b32.xlu0 %v2496, 32
    %v2665 = vpop.permute.xlu0 %2664
    %2666 = vrot.lane.b32.xlu0 %v2497, 32
    %v2667 = vpop.permute.xlu0 %2666
    %2668 = vrot.lane.b32.xlu0 %v2498, 32
    %v2669 = vpop.permute.xlu0 %2668
    %2670 = vrot.lane.b32.xlu0 %v2499, 32
    %v2671 = vpop.permute.xlu0 %2670
    %2672 = vrot.lane.b32.xlu0 %v2500, 32
    %v2673 = vpop.permute.xlu0 %2672
    %2674 = vrot.lane.b32.xlu0 %v2501, 32
    %v2675 = vpop.permute.xlu0 %2674
    %2676 = vrot.lane.b32.xlu0 %v2502, 32
    %v2677 = vpop.permute.xlu0 %2676
    %2678 = vrot.lane.b32.xlu0 %v2503, 32
    %v2679 = vpop.permute.xlu0 %2678
    %2680 = vrot.lane.b32.xlu0 %v2504, 32
    %v2681 = vpop.permute.xlu0 %2680
    %2682 = vrot.lane.b32.xlu0 %v2505, 32
    %v2683 = vpop.permute.xlu0 %2682
    %2684 = vrot.lane.b32.xlu0 %v2506, 32
    %v2685 = vpop.permute.xlu0 %2684
    %2686 = vrot.lane.b32.xlu0 %v2507, 32
    %v2687 = vpop.permute.xlu0 %2686
    %2688 = vrot.lane.b32.xlu0 %v2508, 32
    %v2689 = vpop.permute.xlu0 %2688
    %2690 = vrot.lane.b32.xlu0 %v2509, 32
    %v2691 = vpop.permute.xlu0 %2690
    %2692 = vrot.lane.b32.xlu0 %v2510, 32
    %v2693 = vpop.permute.xlu0 %2692
    %2694 = vrot.lane.b32.xlu0 %v2511, 32
    %v2695 = vpop.permute.xlu0 %2694
    %2696 = vrot.lane.b32.xlu0 %v2512, 32
    %v2697 = vpop.permute.xlu0 %2696
    %2698 = vrot.lane.b32.xlu0 %v2513, 32
    %v2699 = vpop.permute.xlu0 %2698
    %2700 = vrot.lane.b32.xlu0 %v2514, 32
    %v2701 = vpop.permute.xlu0 %2700
    %2702 = vrot.lane.b32.xlu0 %v2515, 32
    %v2703 = vpop.permute.xlu0 %2702
    %2704 = vrot.lane.b32.xlu0 %v2516, 32
    %v2705 = vpop.permute.xlu0 %2704
    %2706 = vrot.lane.b32.xlu0 %v2517, 32
    %v2707 = vpop.permute.xlu0 %2706
    %2708 = vrot.lane.b32.xlu0 %v2518, 32
    %v2709 = vpop.permute.xlu0 %2708
    %2710 = vrot.lane.b32.xlu0 %v2519, 32
    %v2711 = vpop.permute.xlu0 %2710
    %v2776 = vadd.f32 %v2136, %v2585
    %v2777 = vadd.f32 %v2137, %v2587
    %v2778 = vadd.f32 %v2138, %v2589
    %v2779 = vadd.f32 %v2139, %v2591
    %v2780 = vadd.f32 %v2140, %v2593
    %v2781 = vadd.f32 %v2141, %v2595
    %v2782 = vadd.f32 %v2142, %v2597
    %v2783 = vadd.f32 %v2143, %v2599
    %v2784 = vadd.f32 %v2144, %v2601
    %v2785 = vadd.f32 %v2145, %v2603
    %v2786 = vadd.f32 %v2146, %v2605
    %v2787 = vadd.f32 %v2147, %v2607
    %v2788 = vadd.f32 %v2148, %v2609
    %v2789 = vadd.f32 %v2149, %v2611
    %v2790 = vadd.f32 %v2150, %v2613
    %v2791 = vadd.f32 %v2151, %v2615
    %v2792 = vadd.f32 %v2152, %v2617
    %v2793 = vadd.f32 %v2153, %v2619
    %v2794 = vadd.f32 %v2154, %v2621
    %v2795 = vadd.f32 %v2155, %v2623
    %v2796 = vadd.f32 %v2156, %v2625
    %v2797 = vadd.f32 %v2157, %v2627
    %v2798 = vadd.f32 %v2158, %v2629
    %v2799 = vadd.f32 %v2159, %v2631
    %v2800 = vadd.f32 %v2160, %v2633
    %v2801 = vadd.f32 %v2161, %v2635
    %v2802 = vadd.f32 %v2162, %v2637
    %v2803 = vadd.f32 %v2163, %v2639
    %v2804 = vadd.f32 %v2164, %v2641
    %v2805 = vadd.f32 %v2165, %v2643
    %v2806 = vadd.f32 %v2166, %v2645
    %v2807 = vadd.f32 %v2167, %v2647
    %v2808 = vadd.f32 %v2168, %v2649
    %v2809 = vadd.f32 %v2169, %v2651
    %v2810 = vadd.f32 %v2170, %v2653
    %v2811 = vadd.f32 %v2171, %v2655
    %v2812 = vadd.f32 %v2172, %v2657
    %v2813 = vadd.f32 %v2173, %v2659
    %v2814 = vadd.f32 %v2174, %v2661
    %v2815 = vadd.f32 %v2175, %v2663
    %v2816 = vadd.f32 %v2176, %v2665
    %v2817 = vadd.f32 %v2177, %v2667
    %v2818 = vadd.f32 %v2178, %v2669
    %v2819 = vadd.f32 %v2179, %v2671
    %v2820 = vadd.f32 %v2180, %v2673
    %v2821 = vadd.f32 %v2181, %v2675
    %v2822 = vadd.f32 %v2182, %v2677
    %v2823 = vadd.f32 %v2183, %v2679
    %v2824 = vadd.f32 %v2184, %v2681
    %v2825 = vadd.f32 %v2185, %v2683
    %v2826 = vadd.f32 %v2186, %v2685
    %v2827 = vadd.f32 %v2187, %v2687
    %v2828 = vadd.f32 %v2188, %v2689
    %v2829 = vadd.f32 %v2189, %v2691
    %v2830 = vadd.f32 %v2190, %v2693
    %v2831 = vadd.f32 %v2191, %v2695
    %v2832 = vadd.f32 %v2192, %v2697
    %v2833 = vadd.f32 %v2193, %v2699
    %v2834 = vadd.f32 %v2194, %v2701
    %v2835 = vadd.f32 %v2195, %v2703
    %v2836 = vadd.f32 %v2196, %v2705
    %v2837 = vadd.f32 %v2197, %v2707
    %v2838 = vadd.f32 %v2198, %v2709
    %v2839 = vadd.f32 %v2199, %v2711
    %v2840 = vtanh.pop %v2776
    %v2841 = vtanh.pop %v2777
    %v2842 = vtanh.pop %v2778
    %v2843 = vtanh.pop %v2779
    %v2844 = vtanh.pop %v2780
    %v2845 = vtanh.pop %v2781
    %v2846 = vtanh.pop %v2782
    %v2847 = vtanh.pop %v2783
    %v2848 = vtanh.pop %v2784
    %v2849 = vtanh.pop %v2785
    %v2850 = vtanh.pop %v2786
    %v2851 = vtanh.pop %v2787
    %v2852 = vtanh.pop %v2788
    %v2853 = vtanh.pop %v2789
    %v2854 = vtanh.pop %v2790
    %v2855 = vtanh.pop %v2791
    %v2856 = vtanh.pop %v2792
    %v2857 = vtanh.pop %v2793
    %v2858 = vtanh.pop %v2794
    %v2859 = vtanh.pop %v2795
    %v2860 = vtanh.pop %v2796
    %v2861 = vtanh.pop %v2797
    %v2862 = vtanh.pop %v2798
    %v2863 = vtanh.pop %v2799
    %v2864 = vtanh.pop %v2800
    %v2865 = vtanh.pop %v2801
    %v2866 = vtanh.pop %v2802
    %v2867 = vtanh.pop %v2803
    %v2868 = vtanh.pop %v2804
    %v2869 = vtanh.pop %v2805
    %v2870 = vtanh.pop %v2806
    %v2871 = vtanh.pop %v2807
    %v2872 = vtanh.pop %v2808
    %v2873 = vtanh.pop %v2809
    %v2874 = vtanh.pop %v2810
    %v2875 = vtanh.pop %v2811
    %v2876 = vtanh.pop %v2812
    %v2877 = vtanh.pop %v2813
    %v2878 = vtanh.pop %v2814
    %v2879 = vtanh.pop %v2815
    %v2880 = vtanh.pop %v2816
    %v2881 = vtanh.pop %v2817
    %v2882 = vtanh.pop %v2818
    %v2883 = vtanh.pop %v2819
    %v2884 = vtanh.pop %v2820
    %v2885 = vtanh.pop %v2821
    %v2886 = vtanh.pop %v2822
    %v2887 = vtanh.pop %v2823
    %v2888 = vtanh.pop %v2824
    %v2889 = vtanh.pop %v2825
    %v2890 = vtanh.pop %v2826
    %v2891 = vtanh.pop %v2827
    %v2892 = vtanh.pop %v2828
    %v2893 = vtanh.pop %v2829
    %v2894 = vtanh.pop %v2830
    %v2895 = vtanh.pop %v2831
    %v2896 = vtanh.pop %v2832
    %v2897 = vtanh.pop %v2833
    %v2898 = vtanh.pop %v2834
    %v2899 = vtanh.pop %v2835
    %v2900 = vtanh.pop %v2836
    %v2901 = vtanh.pop %v2837
    %v2902 = vtanh.pop %v2838
    %v2903 = vtanh.pop %v2839
    %2968 = vrot.lane.b32.xlu0 %v2840, 32
    %v2969 = vpop.permute.xlu0 %2968
    %2970 = vrot.lane.b32.xlu0 %v2841, 32
    %v2971 = vpop.permute.xlu0 %2970
    %2972 = vrot.lane.b32.xlu0 %v2842, 32
    %v2973 = vpop.permute.xlu0 %2972
    %2974 = vrot.lane.b32.xlu0 %v2843, 32
    %v2975 = vpop.permute.xlu0 %2974
    %2976 = vrot.lane.b32.xlu0 %v2844, 32
    %v2977 = vpop.permute.xlu0 %2976
    %2978 = vrot.lane.b32.xlu0 %v2845, 32
    %v2979 = vpop.permute.xlu0 %2978
    %2980 = vrot.lane.b32.xlu0 %v2846, 32
    %v2981 = vpop.permute.xlu0 %2980
    %2982 = vrot.lane.b32.xlu0 %v2847, 32
    %v2983 = vpop.permute.xlu0 %2982
    %2984 = vrot.lane.b32.xlu0 %v2848, 32
    %v2985 = vpop.permute.xlu0 %2984
    %2986 = vrot.lane.b32.xlu0 %v2849, 32
    %v2987 = vpop.permute.xlu0 %2986
    %2988 = vrot.lane.b32.xlu0 %v2850, 32
    %v2989 = vpop.permute.xlu0 %2988
    %2990 = vrot.lane.b32.xlu0 %v2851, 32
    %v2991 = vpop.permute.xlu0 %2990
    %2992 = vrot.lane.b32.xlu0 %v2852, 32
    %v2993 = vpop.permute.xlu0 %2992
    %2994 = vrot.lane.b32.xlu0 %v2853, 32
    %v2995 = vpop.permute.xlu0 %2994
    %2996 = vrot.lane.b32.xlu0 %v2854, 32
    %v2997 = vpop.permute.xlu0 %2996
    %2998 = vrot.lane.b32.xlu0 %v2855, 32
    %v2999 = vpop.permute.xlu0 %2998
    %3000 = vrot.lane.b32.xlu0 %v2856, 32
    %v3001 = vpop.permute.xlu0 %3000
    %3002 = vrot.lane.b32.xlu0 %v2857, 32
    %v3003 = vpop.permute.xlu0 %3002
    %3004 = vrot.lane.b32.xlu0 %v2858, 32
    %v3005 = vpop.permute.xlu0 %3004
    %3006 = vrot.lane.b32.xlu0 %v2859, 32
    %v3007 = vpop.permute.xlu0 %3006
    %3008 = vrot.lane.b32.xlu0 %v2860, 32
    %v3009 = vpop.permute.xlu0 %3008
    %3010 = vrot.lane.b32.xlu0 %v2861, 32
    %v3011 = vpop.permute.xlu0 %3010
    %3012 = vrot.lane.b32.xlu0 %v2862, 32
    %v3013 = vpop.permute.xlu0 %3012
    %3014 = vrot.lane.b32.xlu0 %v2863, 32
    %v3015 = vpop.permute.xlu0 %3014
    %3016 = vrot.lane.b32.xlu0 %v2864, 32
    %v3017 = vpop.permute.xlu0 %3016
    %3018 = vrot.lane.b32.xlu0 %v2865, 32
    %v3019 = vpop.permute.xlu0 %3018
    %3020 = vrot.lane.b32.xlu0 %v2866, 32
    %v3021 = vpop.permute.xlu0 %3020
    %3022 = vrot.lane.b32.xlu0 %v2867, 32
    %v3023 = vpop.permute.xlu0 %3022
    %3024 = vrot.lane.b32.xlu0 %v2868, 32
    %v3025 = vpop.permute.xlu0 %3024
    %3026 = vrot.lane.b32.xlu0 %v2869, 32
    %v3027 = vpop.permute.xlu0 %3026
    %3028 = vrot.lane.b32.xlu0 %v2870, 32
    %v3029 = vpop.permute.xlu0 %3028
    %3030 = vrot.lane.b32.xlu0 %v2871, 32
    %v3031 = vpop.permute.xlu0 %3030
    %3032 = vrot.lane.b32.xlu0 %v2872, 32
    %v3033 = vpop.permute.xlu0 %3032
    %3034 = vrot.lane.b32.xlu0 %v2873, 32
    %v3035 = vpop.permute.xlu0 %3034
    %3036 = vrot.lane.b32.xlu0 %v2874, 32
    %v3037 = vpop.permute.xlu0 %3036
    %3038 = vrot.lane.b32.xlu0 %v2875, 32
    %v3039 = vpop.permute.xlu0 %3038
    %3040 = vrot.lane.b32.xlu0 %v2876, 32
    %v3041 = vpop.permute.xlu0 %3040
    %3042 = vrot.lane.b32.xlu0 %v2877, 32
    %v3043 = vpop.permute.xlu0 %3042
    %3044 = vrot.lane.b32.xlu0 %v2878, 32
    %v3045 = vpop.permute.xlu0 %3044
    %3046 = vrot.lane.b32.xlu0 %v2879, 32
    %v3047 = vpop.permute.xlu0 %3046
    %3048 = vrot.lane.b32.xlu0 %v2880, 32
    %v3049 = vpop.permute.xlu0 %3048
    %3050 = vrot.lane.b32.xlu0 %v2881, 32
    %v3051 = vpop.permute.xlu0 %3050
    %3052 = vrot.lane.b32.xlu0 %v2882, 32
    %v3053 = vpop.permute.xlu0 %3052
    %3054 = vrot.lane.b32.xlu0 %v2883, 32
    %v3055 = vpop.permute.xlu0 %3054
    %3056 = vrot.lane.b32.xlu0 %v2884, 32
    %v3057 = vpop.permute.xlu0 %3056
    %3058 = vrot.lane.b32.xlu0 %v2885, 32
    %v3059 = vpop.permute.xlu0 %3058
    %3060 = vrot.lane.b32.xlu0 %v2886, 32
    %v3061 = vpop.permute.xlu0 %3060
    %3062 = vrot.lane.b32.xlu0 %v2887, 32
    %v3063 = vpop.permute.xlu0 %3062
    %3064 = vrot.lane.b32.xlu0 %v2888, 32
    %v3065 = vpop.permute.xlu0 %3064
    %3066 = vrot.lane.b32.xlu0 %v2889, 32
    %v3067 = vpop.permute.xlu0 %3066
    %3068 = vrot.lane.b32.xlu0 %v2890, 32
    %v3069 = vpop.permute.xlu0 %3068
    %3070 = vrot.lane.b32.xlu0 %v2891, 32
    %v3071 = vpop.permute.xlu0 %3070
    %3072 = vrot.lane.b32.xlu0 %v2892, 32
    %v3073 = vpop.permute.xlu0 %3072
    %3074 = vrot.lane.b32.xlu0 %v2893, 32
    %v3075 = vpop.permute.xlu0 %3074
    %3076 = vrot.lane.b32.xlu0 %v2894, 32
    %v3077 = vpop.permute.xlu0 %3076
    %3078 = vrot.lane.b32.xlu0 %v2895, 32
    %v3079 = vpop.permute.xlu0 %3078
    %3080 = vrot.lane.b32.xlu0 %v2896, 32
    %v3081 = vpop.permute.xlu0 %3080
    %3082 = vrot.lane.b32.xlu0 %v2897, 32
    %v3083 = vpop.permute.xlu0 %3082
    %3084 = vrot.lane.b32.xlu0 %v2898, 32
    %v3085 = vpop.permute.xlu0 %3084
    %3086 = vrot.lane.b32.xlu0 %v2899, 32
    %v3087 = vpop.permute.xlu0 %3086
    %3088 = vrot.lane.b32.xlu0 %v2900, 32
    %v3089 = vpop.permute.xlu0 %3088
    %3090 = vrot.lane.b32.xlu0 %v2901, 32
    %v3091 = vpop.permute.xlu0 %3090
    %3092 = vrot.lane.b32.xlu0 %v2902, 32
    %v3093 = vpop.permute.xlu0 %3092
    %3094 = vrot.lane.b32.xlu0 %v2903, 32
    %v3095 = vpop.permute.xlu0 %3094
    %v3160 = vmul.f32 %v1752, %v2969
    %v3161 = vmul.f32 %v1753, %v2971
    %v3162 = vmul.f32 %v1754, %v2973
    %v3163 = vmul.f32 %v1755, %v2975
    %v3164 = vmul.f32 %v1756, %v2977
    %v3165 = vmul.f32 %v1757, %v2979
    %v3166 = vmul.f32 %v1758, %v2981
    %v3167 = vmul.f32 %v1759, %v2983
    %v3168 = vmul.f32 %v1760, %v2985
    %v3169 = vmul.f32 %v1761, %v2987
    %v3170 = vmul.f32 %v1762, %v2989
    %v3171 = vmul.f32 %v1763, %v2991
    %v3172 = vmul.f32 %v1764, %v2993
    %v3173 = vmul.f32 %v1765, %v2995
    %v3174 = vmul.f32 %v1766, %v2997
    %v3175 = vmul.f32 %v1767, %v2999
    %v3176 = vmul.f32 %v1768, %v3001
    %v3177 = vmul.f32 %v1769, %v3003
    %v3178 = vmul.f32 %v1770, %v3005
    %v3179 = vmul.f32 %v1771, %v3007
    %v3180 = vmul.f32 %v1772, %v3009
    %v3181 = vmul.f32 %v1773, %v3011
    %v3182 = vmul.f32 %v1774, %v3013
    %v3183 = vmul.f32 %v1775, %v3015
    %v3184 = vmul.f32 %v1776, %v3017
    %v3185 = vmul.f32 %v1777, %v3019
    %v3186 = vmul.f32 %v1778, %v3021
    %v3187 = vmul.f32 %v1779, %v3023
    %v3188 = vmul.f32 %v1780, %v3025
    %v3189 = vmul.f32 %v1781, %v3027
    %v3190 = vmul.f32 %v1782, %v3029
    %v3191 = vmul.f32 %v1783, %v3031
    %v3192 = vmul.f32 %v1784, %v3033
    %v3193 = vmul.f32 %v1785, %v3035
    %v3194 = vmul.f32 %v1786, %v3037
    %v3195 = vmul.f32 %v1787, %v3039
    %v3196 = vmul.f32 %v1788, %v3041
    %v3197 = vmul.f32 %v1789, %v3043
    %v3198 = vmul.f32 %v1790, %v3045
    %v3199 = vmul.f32 %v1791, %v3047
    %v3200 = vmul.f32 %v1792, %v3049
    %v3201 = vmul.f32 %v1793, %v3051
    %v3202 = vmul.f32 %v1794, %v3053
    %v3203 = vmul.f32 %v1795, %v3055
    %v3204 = vmul.f32 %v1796, %v3057
    %v3205 = vmul.f32 %v1797, %v3059
    %v3206 = vmul.f32 %v1798, %v3061
    %v3207 = vmul.f32 %v1799, %v3063
    %v3208 = vmul.f32 %v1800, %v3065
    %v3209 = vmul.f32 %v1801, %v3067
    %v3210 = vmul.f32 %v1802, %v3069
    %v3211 = vmul.f32 %v1803, %v3071
    %v3212 = vmul.f32 %v1804, %v3073
    %v3213 = vmul.f32 %v1805, %v3075
    %v3214 = vmul.f32 %v1806, %v3077
    %v3215 = vmul.f32 %v1807, %v3079
    %v3216 = vmul.f32 %v1808, %v3081
    %v3217 = vmul.f32 %v1809, %v3083
    %v3218 = vmul.f32 %v1810, %v3085
    %v3219 = vmul.f32 %v1811, %v3087
    %v3220 = vmul.f32 %v1812, %v3089
    %v3221 = vmul.f32 %v1813, %v3091
    %v3222 = vmul.f32 %v1814, %v3093
    %v3223 = vmul.f32 %v1815, %v3095
    %3288 = vrot.lane.b32.xlu0 %v2776, 96
    %v3289 = vpop.permute.xlu0 %3288
    %3290 = vrot.lane.b32.xlu0 %v2777, 96
    %v3291 = vpop.permute.xlu0 %3290
    %3292 = vrot.lane.b32.xlu0 %v2778, 96
    %v3293 = vpop.permute.xlu0 %3292
    %3294 = vrot.lane.b32.xlu0 %v2779, 96
    %v3295 = vpop.permute.xlu0 %3294
    %3296 = vrot.lane.b32.xlu0 %v2780, 96
    %v3297 = vpop.permute.xlu0 %3296
    %3298 = vrot.lane.b32.xlu0 %v2781, 96
    %v3299 = vpop.permute.xlu0 %3298
    %3300 = vrot.lane.b32.xlu0 %v2782, 96
    %v3301 = vpop.permute.xlu0 %3300
    %3302 = vrot.lane.b32.xlu0 %v2783, 96
    %v3303 = vpop.permute.xlu0 %3302
    %3304 = vrot.lane.b32.xlu0 %v2784, 96
    %v3305 = vpop.permute.xlu0 %3304
    %3306 = vrot.lane.b32.xlu0 %v2785, 96
    %v3307 = vpop.permute.xlu0 %3306
    %3308 = vrot.lane.b32.xlu0 %v2786, 96
    %v3309 = vpop.permute.xlu0 %3308
    %3310 = vrot.lane.b32.xlu0 %v2787, 96
    %v3311 = vpop.permute.xlu0 %3310
    %3312 = vrot.lane.b32.xlu0 %v2788, 96
    %v3313 = vpop.permute.xlu0 %3312
    %3314 = vrot.lane.b32.xlu0 %v2789, 96
    %v3315 = vpop.permute.xlu0 %3314
    %3316 = vrot.lane.b32.xlu0 %v2790, 96
    %v3317 = vpop.permute.xlu0 %3316
    %3318 = vrot.lane.b32.xlu0 %v2791, 96
    %v3319 = vpop.permute.xlu0 %3318
    %3320 = vrot.lane.b32.xlu0 %v2792, 96
    %v3321 = vpop.permute.xlu0 %3320
    %3322 = vrot.lane.b32.xlu0 %v2793, 96
    %v3323 = vpop.permute.xlu0 %3322
    %3324 = vrot.lane.b32.xlu0 %v2794, 96
    %v3325 = vpop.permute.xlu0 %3324
    %3326 = vrot.lane.b32.xlu0 %v2795, 96
    %v3327 = vpop.permute.xlu0 %3326
    %3328 = vrot.lane.b32.xlu0 %v2796, 96
    %v3329 = vpop.permute.xlu0 %3328
    %3330 = vrot.lane.b32.xlu0 %v2797, 96
    %v3331 = vpop.permute.xlu0 %3330
    %3332 = vrot.lane.b32.xlu0 %v2798, 96
    %v3333 = vpop.permute.xlu0 %3332
    %3334 = vrot.lane.b32.xlu0 %v2799, 96
    %v3335 = vpop.permute.xlu0 %3334
    %3336 = vrot.lane.b32.xlu0 %v2800, 96
    %v3337 = vpop.permute.xlu0 %3336
    %3338 = vrot.lane.b32.xlu0 %v2801, 96
    %v3339 = vpop.permute.xlu0 %3338
    %3340 = vrot.lane.b32.xlu0 %v2802, 96
    %v3341 = vpop.permute.xlu0 %3340
    %3342 = vrot.lane.b32.xlu0 %v2803, 96
    %v3343 = vpop.permute.xlu0 %3342
    %3344 = vrot.lane.b32.xlu0 %v2804, 96
    %v3345 = vpop.permute.xlu0 %3344
    %3346 = vrot.lane.b32.xlu0 %v2805, 96
    %v3347 = vpop.permute.xlu0 %3346
    %3348 = vrot.lane.b32.xlu0 %v2806, 96
    %v3349 = vpop.permute.xlu0 %3348
    %3350 = vrot.lane.b32.xlu0 %v2807, 96
    %v3351 = vpop.permute.xlu0 %3350
    %3352 = vrot.lane.b32.xlu0 %v2808, 96
    %v3353 = vpop.permute.xlu0 %3352
    %3354 = vrot.lane.b32.xlu0 %v2809, 96
    %v3355 = vpop.permute.xlu0 %3354
    %3356 = vrot.lane.b32.xlu0 %v2810, 96
    %v3357 = vpop.permute.xlu0 %3356
    %3358 = vrot.lane.b32.xlu0 %v2811, 96
    %v3359 = vpop.permute.xlu0 %3358
    %3360 = vrot.lane.b32.xlu0 %v2812, 96
    %v3361 = vpop.permute.xlu0 %3360
    %3362 = vrot.lane.b32.xlu0 %v2813, 96
    %v3363 = vpop.permute.xlu0 %3362
    %3364 = vrot.lane.b32.xlu0 %v2814, 96
    %v3365 = vpop.permute.xlu0 %3364
    %3366 = vrot.lane.b32.xlu0 %v2815, 96
    %v3367 = vpop.permute.xlu0 %3366
    %3368 = vrot.lane.b32.xlu0 %v2816, 96
    %v3369 = vpop.permute.xlu0 %3368
    %3370 = vrot.lane.b32.xlu0 %v2817, 96
    %v3371 = vpop.permute.xlu0 %3370
    %3372 = vrot.lane.b32.xlu0 %v2818, 96
    %v3373 = vpop.permute.xlu0 %3372
    %3374 = vrot.lane.b32.xlu0 %v2819, 96
    %v3375 = vpop.permute.xlu0 %3374
    %3376 = vrot.lane.b32.xlu0 %v2820, 96
    %v3377 = vpop.permute.xlu0 %3376
    %3378 = vrot.lane.b32.xlu0 %v2821, 96
    %v3379 = vpop.permute.xlu0 %3378
    %3380 = vrot.lane.b32.xlu0 %v2822, 96
    %v3381 = vpop.permute.xlu0 %3380
    %3382 = vrot.lane.b32.xlu0 %v2823, 96
    %v3383 = vpop.permute.xlu0 %3382
    %3384 = vrot.lane.b32.xlu0 %v2824, 96
    %v3385 = vpop.permute.xlu0 %3384
    %3386 = vrot.lane.b32.xlu0 %v2825, 96
    %v3387 = vpop.permute.xlu0 %3386
    %3388 = vrot.lane.b32.xlu0 %v2826, 96
    %v3389 = vpop.permute.xlu0 %3388
    %3390 = vrot.lane.b32.xlu0 %v2827, 96
    %v3391 = vpop.permute.xlu0 %3390
    %3392 = vrot.lane.b32.xlu0 %v2828, 96
    %v3393 = vpop.permute.xlu0 %3392
    %3394 = vrot.lane.b32.xlu0 %v2829, 96
    %v3395 = vpop.permute.xlu0 %3394
    %3396 = vrot.lane.b32.xlu0 %v2830, 96
    %v3397 = vpop.permute.xlu0 %3396
    %3398 = vrot.lane.b32.xlu0 %v2831, 96
    %v3399 = vpop.permute.xlu0 %3398
    %3400 = vrot.lane.b32.xlu0 %v2832, 96
    %v3401 = vpop.permute.xlu0 %3400
    %3402 = vrot.lane.b32.xlu0 %v2833, 96
    %v3403 = vpop.permute.xlu0 %3402
    %3404 = vrot.lane.b32.xlu0 %v2834, 96
    %v3405 = vpop.permute.xlu0 %3404
    %3406 = vrot.lane.b32.xlu0 %v2835, 96
    %v3407 = vpop.permute.xlu0 %3406
    %3408 = vrot.lane.b32.xlu0 %v2836, 96
    %v3409 = vpop.permute.xlu0 %3408
    %3410 = vrot.lane.b32.xlu0 %v2837, 96
    %v3411 = vpop.permute.xlu0 %3410
    %3412 = vrot.lane.b32.xlu0 %v2838, 96
    %v3413 = vpop.permute.xlu0 %3412
    %3414 = vrot.lane.b32.xlu0 %v2839, 96
    %v3415 = vpop.permute.xlu0 %3414
    %vm3480 = vcmask 261120
    %3481 = vst.msk [vmem:[#allocation4] sm:$0xff] %vm3480, %v3289
    %3482 = vst.msk [vmem:[#allocation4 + $0x8] sm:$0xff] %vm3480, %v3291
    %3483 = vst.msk [vmem:[#allocation4 + $0x10] sm:$0xff] %vm3480, %v3293
    %3484 = vst.msk [vmem:[#allocation4 + $0x18] sm:$0xff] %vm3480, %v3295
    %3485 = vst.msk [vmem:[#allocation4 + $0x20] sm:$0xff] %vm3480, %v3297
    %3486 = vst.msk [vmem:[#allocation4 + $0x28] sm:$0xff] %vm3480, %v3299
    %3487 = vst.msk [vmem:[#allocation4 + $0x30] sm:$0xff] %vm3480, %v3301
    %3488 = vst.msk [vmem:[#allocation4 + $0x38] sm:$0xff] %vm3480, %v3303
    %3489 = vst.msk [vmem:[#allocation4 + $0x40] sm:$0xff] %vm3480, %v3305
    %3490 = vst.msk [vmem:[#allocation4 + $0x48] sm:$0xff] %vm3480, %v3307
    %3491 = vst.msk [vmem:[#allocation4 + $0x50] sm:$0xff] %vm3480, %v3309
    %3492 = vst.msk [vmem:[#allocation4 + $0x58] sm:$0xff] %vm3480, %v3311
    %3493 = vst.msk [vmem:[#allocation4 + $0x60] sm:$0xff] %vm3480, %v3313
    %3494 = vst.msk [vmem:[#allocation4 + $0x68] sm:$0xff] %vm3480, %v3315
    %3495 = vst.msk [vmem:[#allocation4 + $0x70] sm:$0xff] %vm3480, %v3317
    %3496 = vst.msk [vmem:[#allocation4 + $0x78] sm:$0xff] %vm3480, %v3319
    %3497 = vst.msk [vmem:[#allocation4 + $0x80] sm:$0xff] %vm3480, %v3321
    %3498 = vst.msk [vmem:[#allocation4 + $0x88] sm:$0xff] %vm3480, %v3323
    %3499 = vst.msk [vmem:[#allocation4 + $0x90] sm:$0xff] %vm3480, %v3325
    %3500 = vst.msk [vmem:[#allocation4 + $0x98] sm:$0xff] %vm3480, %v3327
    %3501 = vst.msk [vmem:[#allocation4 + $0xa0] sm:$0xff] %vm3480, %v3329
    %3502 = vst.msk [vmem:[#allocation4 + $0xa8] sm:$0xff] %vm3480, %v3331
    %3503 = vst.msk [vmem:[#allocation4 + $0xb0] sm:$0xff] %vm3480, %v3333
    %3504 = vst.msk [vmem:[#allocation4 + $0xb8] sm:$0xff] %vm3480, %v3335
    %3505 = vst.msk [vmem:[#allocation4 + $0xc0] sm:$0xff] %vm3480, %v3337
    %3506 = vst.msk [vmem:[#allocation4 + $0xc8] sm:$0xff] %vm3480, %v3339
    %3507 = vst.msk [vmem:[#allocation4 + $0xd0] sm:$0xff] %vm3480, %v3341
    %3508 = vst.msk [vmem:[#allocation4 + $0xd8] sm:$0xff] %vm3480, %v3343
    %3509 = vst.msk [vmem:[#allocation4 + $0xe0] sm:$0xff] %vm3480, %v3345
    %3510 = vst.msk [vmem:[#allocation4 + $0xe8] sm:$0xff] %vm3480, %v3347
    %3511 = vst.msk [vmem:[#allocation4 + $0xf0] sm:$0xff] %vm3480, %v3349
    %3512 = vst.msk [vmem:[#allocation4 + $0xf8] sm:$0xff] %vm3480, %v3351
    %3513 = vst.msk [vmem:[#allocation4 + $0x100] sm:$0xff] %vm3480, %v3353
    %3514 = vst.msk [vmem:[#allocation4 + $0x108] sm:$0xff] %vm3480, %v3355
    %3515 = vst.msk [vmem:[#allocation4 + $0x110] sm:$0xff] %vm3480, %v3357
    %3516 = vst.msk [vmem:[#allocation4 + $0x118] sm:$0xff] %vm3480, %v3359
    %3517 = vst.msk [vmem:[#allocation4 + $0x120] sm:$0xff] %vm3480, %v3361
    %3518 = vst.msk [vmem:[#allocation4 + $0x128] sm:$0xff] %vm3480, %v3363
    %3519 = vst.msk [vmem:[#allocation4 + $0x130] sm:$0xff] %vm3480, %v3365
    %3520 = vst.msk [vmem:[#allocation4 + $0x138] sm:$0xff] %vm3480, %v3367
    %3521 = vst.msk [vmem:[#allocation4 + $0x140] sm:$0xff] %vm3480, %v3369
    %3522 = vst.msk [vmem:[#allocation4 + $0x148] sm:$0xff] %vm3480, %v3371
    %3523 = vst.msk [vmem:[#allocation4 + $0x150] sm:$0xff] %vm3480, %v3373
    %3524 = vst.msk [vmem:[#allocation4 + $0x158] sm:$0xff] %vm3480, %v3375
    %3525 = vst.msk [vmem:[#allocation4 + $0x160] sm:$0xff] %vm3480, %v3377
    %3526 = vst.msk [vmem:[#allocation4 + $0x168] sm:$0xff] %vm3480, %v3379
    %3527 = vst.msk [vmem:[#allocation4 + $0x170] sm:$0xff] %vm3480, %v3381
    %3528 = vst.msk [vmem:[#allocation4 + $0x178] sm:$0xff] %vm3480, %v3383
    %3529 = vst.msk [vmem:[#allocation4 + $0x180] sm:$0xff] %vm3480, %v3385
    %3530 = vst.msk [vmem:[#allocation4 + $0x188] sm:$0xff] %vm3480, %v3387
    %3531 = vst.msk [vmem:[#allocation4 + $0x190] sm:$0xff] %vm3480, %v3389
    %3532 = vst.msk [vmem:[#allocation4 + $0x198] sm:$0xff] %vm3480, %v3391
    %3533 = vst.msk [vmem:[#allocation4 + $0x1a0] sm:$0xff] %vm3480, %v3393
    %3534 = vst.msk [vmem:[#allocation4 + $0x1a8] sm:$0xff] %vm3480, %v3395
    %3535 = vst.msk [vmem:[#allocation4 + $0x1b0] sm:$0xff] %vm3480, %v3397
    %3536 = vst.msk [vmem:[#allocation4 + $0x1b8] sm:$0xff] %vm3480, %v3399
    %3537 = vst.msk [vmem:[#allocation4 + $0x1c0] sm:$0xff] %vm3480, %v3401
    %3538 = vst.msk [vmem:[#allocation4 + $0x1c8] sm:$0xff] %vm3480, %v3403
    %3539 = vst.msk [vmem:[#allocation4 + $0x1d0] sm:$0xff] %vm3480, %v3405
    %3540 = vst.msk [vmem:[#allocation4 + $0x1d8] sm:$0xff] %vm3480, %v3407
    %3541 = vst.msk [vmem:[#allocation4 + $0x1e0] sm:$0xff] %vm3480, %v3409
    %3542 = vst.msk [vmem:[#allocation4 + $0x1e8] sm:$0xff] %vm3480, %v3411
    %3543 = vst.msk [vmem:[#allocation4 + $0x1f0] sm:$0xff] %vm3480, %v3413
    %3544 = vst.msk [vmem:[#allocation4 + $0x1f8] sm:$0xff] %vm3480, %v3415
    %3609 = vrot.lane.b32.xlu0 %v3160, 64
    %v3610 = vpop.permute.xlu0 %3609
    %3611 = vrot.lane.b32.xlu0 %v3161, 64
    %v3612 = vpop.permute.xlu0 %3611
    %3613 = vrot.lane.b32.xlu0 %v3162, 64
    %v3614 = vpop.permute.xlu0 %3613
    %3615 = vrot.lane.b32.xlu0 %v3163, 64
    %v3616 = vpop.permute.xlu0 %3615
    %3617 = vrot.lane.b32.xlu0 %v3164, 64
    %v3618 = vpop.permute.xlu0 %3617
    %3619 = vrot.lane.b32.xlu0 %v3165, 64
    %v3620 = vpop.permute.xlu0 %3619
    %3621 = vrot.lane.b32.xlu0 %v3166, 64
    %v3622 = vpop.permute.xlu0 %3621
    %3623 = vrot.lane.b32.xlu0 %v3167, 64
    %v3624 = vpop.permute.xlu0 %3623
    %3625 = vrot.lane.b32.xlu0 %v3168, 64
    %v3626 = vpop.permute.xlu0 %3625
    %3627 = vrot.lane.b32.xlu0 %v3169, 64
    %v3628 = vpop.permute.xlu0 %3627
    %3629 = vrot.lane.b32.xlu0 %v3170, 64
    %v3630 = vpop.permute.xlu0 %3629
    %3631 = vrot.lane.b32.xlu0 %v3171, 64
    %v3632 = vpop.permute.xlu0 %3631
    %3633 = vrot.lane.b32.xlu0 %v3172, 64
    %v3634 = vpop.permute.xlu0 %3633
    %3635 = vrot.lane.b32.xlu0 %v3173, 64
    %v3636 = vpop.permute.xlu0 %3635
    %3637 = vrot.lane.b32.xlu0 %v3174, 64
    %v3638 = vpop.permute.xlu0 %3637
    %3639 = vrot.lane.b32.xlu0 %v3175, 64
    %v3640 = vpop.permute.xlu0 %3639
    %3641 = vrot.lane.b32.xlu0 %v3176, 64
    %v3642 = vpop.permute.xlu0 %3641
    %3643 = vrot.lane.b32.xlu0 %v3177, 64
    %v3644 = vpop.permute.xlu0 %3643
    %3645 = vrot.lane.b32.xlu0 %v3178, 64
    %v3646 = vpop.permute.xlu0 %3645
    %3647 = vrot.lane.b32.xlu0 %v3179, 64
    %v3648 = vpop.permute.xlu0 %3647
    %3649 = vrot.lane.b32.xlu0 %v3180, 64
    %v3650 = vpop.permute.xlu0 %3649
    %3651 = vrot.lane.b32.xlu0 %v3181, 64
    %v3652 = vpop.permute.xlu0 %3651
    %3653 = vrot.lane.b32.xlu0 %v3182, 64
    %v3654 = vpop.permute.xlu0 %3653
    %3655 = vrot.lane.b32.xlu0 %v3183, 64
    %v3656 = vpop.permute.xlu0 %3655
    %3657 = vrot.lane.b32.xlu0 %v3184, 64
    %v3658 = vpop.permute.xlu0 %3657
    %3659 = vrot.lane.b32.xlu0 %v3185, 64
    %v3660 = vpop.permute.xlu0 %3659
    %3661 = vrot.lane.b32.xlu0 %v3186, 64
    %v3662 = vpop.permute.xlu0 %3661
    %3663 = vrot.lane.b32.xlu0 %v3187, 64
    %v3664 = vpop.permute.xlu0 %3663
    %3665 = vrot.lane.b32.xlu0 %v3188, 64
    %v3666 = vpop.permute.xlu0 %3665
    %3667 = vrot.lane.b32.xlu0 %v3189, 64
    %v3668 = vpop.permute.xlu0 %3667
    %3669 = vrot.lane.b32.xlu0 %v3190, 64
    %v3670 = vpop.permute.xlu0 %3669
    %3671 = vrot.lane.b32.xlu0 %v3191, 64
    %v3672 = vpop.permute.xlu0 %3671
    %3673 = vrot.lane.b32.xlu0 %v3192, 64
    %v3674 = vpop.permute.xlu0 %3673
    %3675 = vrot.lane.b32.xlu0 %v3193, 64
    %v3676 = vpop.permute.xlu0 %3675
    %3677 = vrot.lane.b32.xlu0 %v3194, 64
    %v3678 = vpop.permute.xlu0 %3677
    %3679 = vrot.lane.b32.xlu0 %v3195, 64
    %v3680 = vpop.permute.xlu0 %3679
    %3681 = vrot.lane.b32.xlu0 %v3196, 64
    %v3682 = vpop.permute.xlu0 %3681
    %3683 = vrot.lane.b32.xlu0 %v3197, 64
    %v3684 = vpop.permute.xlu0 %3683
    %3685 = vrot.lane.b32.xlu0 %v3198, 64
    %v3686 = vpop.permute.xlu0 %3685
    %3687 = vrot.lane.b32.xlu0 %v3199, 64
    %v3688 = vpop.permute.xlu0 %3687
    %3689 = vrot.lane.b32.xlu0 %v3200, 64
    %v3690 = vpop.permute.xlu0 %3689
    %3691 = vrot.lane.b32.xlu0 %v3201, 64
    %v3692 = vpop.permute.xlu0 %3691
    %3693 = vrot.lane.b32.xlu0 %v3202, 64
    %v3694 = vpop.permute.xlu0 %3693
    %3695 = vrot.lane.b32.xlu0 %v3203, 64
    %v3696 = vpop.permute.xlu0 %3695
    %3697 = vrot.lane.b32.xlu0 %v3204, 64
    %v3698 = vpop.permute.xlu0 %3697
    %3699 = vrot.lane.b32.xlu0 %v3205, 64
    %v3700 = vpop.permute.xlu0 %3699
    %3701 = vrot.lane.b32.xlu0 %v3206, 64
    %v3702 = vpop.permute.xlu0 %3701
    %3703 = vrot.lane.b32.xlu0 %v3207, 64
    %v3704 = vpop.permute.xlu0 %3703
    %3705 = vrot.lane.b32.xlu0 %v3208, 64
    %v3706 = vpop.permute.xlu0 %3705
    %3707 = vrot.lane.b32.xlu0 %v3209, 64
    %v3708 = vpop.permute.xlu0 %3707
    %3709 = vrot.lane.b32.xlu0 %v3210, 64
    %v3710 = vpop.permute.xlu0 %3709
    %3711 = vrot.lane.b32.xlu0 %v3211, 64
    %v3712 = vpop.permute.xlu0 %3711
    %3713 = vrot.lane.b32.xlu0 %v3212, 64
    %v3714 = vpop.permute.xlu0 %3713
    %3715 = vrot.lane.b32.xlu0 %v3213, 64
    %v3716 = vpop.permute.xlu0 %3715
    %3717 = vrot.lane.b32.xlu0 %v3214, 64
    %v3718 = vpop.permute.xlu0 %3717
    %3719 = vrot.lane.b32.xlu0 %v3215, 64
    %v3720 = vpop.permute.xlu0 %3719
    %3721 = vrot.lane.b32.xlu0 %v3216, 64
    %v3722 = vpop.permute.xlu0 %3721
    %3723 = vrot.lane.b32.xlu0 %v3217, 64
    %v3724 = vpop.permute.xlu0 %3723
    %3725 = vrot.lane.b32.xlu0 %v3218, 64
    %v3726 = vpop.permute.xlu0 %3725
    %3727 = vrot.lane.b32.xlu0 %v3219, 64
    %v3728 = vpop.permute.xlu0 %3727
    %3729 = vrot.lane.b32.xlu0 %v3220, 64
    %v3730 = vpop.permute.xlu0 %3729
    %3731 = vrot.lane.b32.xlu0 %v3221, 64
    %v3732 = vpop.permute.xlu0 %3731
    %3733 = vrot.lane.b32.xlu0 %v3222, 64
    %v3734 = vpop.permute.xlu0 %3733
    %3735 = vrot.lane.b32.xlu0 %v3223, 64
    %v3736 = vpop.permute.xlu0 %3735
    %3801 = vst.msk [vmem:[#allocation2] sm:$0xff] %vm3480, %v3610
    %3802 = vst.msk [vmem:[#allocation2 + $0x8] sm:$0xff] %vm3480, %v3612
    %3803 = vst.msk [vmem:[#allocation2 + $0x10] sm:$0xff] %vm3480, %v3614
    %3804 = vst.msk [vmem:[#allocation2 + $0x18] sm:$0xff] %vm3480, %v3616
    %3805 = vst.msk [vmem:[#allocation2 + $0x20] sm:$0xff] %vm3480, %v3618
    %3806 = vst.msk [vmem:[#allocation2 + $0x28] sm:$0xff] %vm3480, %v3620
    %3807 = vst.msk [vmem:[#allocation2 + $0x30] sm:$0xff] %vm3480, %v3622
    %3808 = vst.msk [vmem:[#allocation2 + $0x38] sm:$0xff] %vm3480, %v3624
    %3809 = vst.msk [vmem:[#allocation2 + $0x40] sm:$0xff] %vm3480, %v3626
    %3810 = vst.msk [vmem:[#allocation2 + $0x48] sm:$0xff] %vm3480, %v3628
    %3811 = vst.msk [vmem:[#allocation2 + $0x50] sm:$0xff] %vm3480, %v3630
    %3812 = vst.msk [vmem:[#allocation2 + $0x58] sm:$0xff] %vm3480, %v3632
    %3813 = vst.msk [vmem:[#allocation2 + $0x60] sm:$0xff] %vm3480, %v3634
    %3814 = vst.msk [vmem:[#allocation2 + $0x68] sm:$0xff] %vm3480, %v3636
    %3815 = vst.msk [vmem:[#allocation2 + $0x70] sm:$0xff] %vm3480, %v3638
    %3816 = vst.msk [vmem:[#allocation2 + $0x78] sm:$0xff] %vm3480, %v3640
    %3817 = vst.msk [vmem:[#allocation2 + $0x80] sm:$0xff] %vm3480, %v3642
    %3818 = vst.msk [vmem:[#allocation2 + $0x88] sm:$0xff] %vm3480, %v3644
    %3819 = vst.msk [vmem:[#allocation2 + $0x90] sm:$0xff] %vm3480, %v3646
    %3820 = vst.msk [vmem:[#allocation2 + $0x98] sm:$0xff] %vm3480, %v3648
    %3821 = vst.msk [vmem:[#allocation2 + $0xa0] sm:$0xff] %vm3480, %v3650
    %3822 = vst.msk [vmem:[#allocation2 + $0xa8] sm:$0xff] %vm3480, %v3652
    %3823 = vst.msk [vmem:[#allocation2 + $0xb0] sm:$0xff] %vm3480, %v3654
    %3824 = vst.msk [vmem:[#allocation2 + $0xb8] sm:$0xff] %vm3480, %v3656
    %3825 = vst.msk [vmem:[#allocation2 + $0xc0] sm:$0xff] %vm3480, %v3658
    %3826 = vst.msk [vmem:[#allocation2 + $0xc8] sm:$0xff] %vm3480, %v3660
    %3827 = vst.msk [vmem:[#allocation2 + $0xd0] sm:$0xff] %vm3480, %v3662
    %3828 = vst.msk [vmem:[#allocation2 + $0xd8] sm:$0xff] %vm3480, %v3664
    %3829 = vst.msk [vmem:[#allocation2 + $0xe0] sm:$0xff] %vm3480, %v3666
    %3830 = vst.msk [vmem:[#allocation2 + $0xe8] sm:$0xff] %vm3480, %v3668
    %3831 = vst.msk [vmem:[#allocation2 + $0xf0] sm:$0xff] %vm3480, %v3670
    %3832 = vst.msk [vmem:[#allocation2 + $0xf8] sm:$0xff] %vm3480, %v3672
    %3833 = vst.msk [vmem:[#allocation2 + $0x100] sm:$0xff] %vm3480, %v3674
    %3834 = vst.msk [vmem:[#allocation2 + $0x108] sm:$0xff] %vm3480, %v3676
    %3835 = vst.msk [vmem:[#allocation2 + $0x110] sm:$0xff] %vm3480, %v3678
    %3836 = vst.msk [vmem:[#allocation2 + $0x118] sm:$0xff] %vm3480, %v3680
    %3837 = vst.msk [vmem:[#allocation2 + $0x120] sm:$0xff] %vm3480, %v3682
    %3838 = vst.msk [vmem:[#allocation2 + $0x128] sm:$0xff] %vm3480, %v3684
    %3839 = vst.msk [vmem:[#allocation2 + $0x130] sm:$0xff] %vm3480, %v3686
    %3840 = vst.msk [vmem:[#allocation2 + $0x138] sm:$0xff] %vm3480, %v3688
    %3841 = vst.msk [vmem:[#allocation2 + $0x140] sm:$0xff] %vm3480, %v3690
    %3842 = vst.msk [vmem:[#allocation2 + $0x148] sm:$0xff] %vm3480, %v3692
    %3843 = vst.msk [vmem:[#allocation2 + $0x150] sm:$0xff] %vm3480, %v3694
    %3844 = vst.msk [vmem:[#allocation2 + $0x158] sm:$0xff] %vm3480, %v3696
    %3845 = vst.msk [vmem:[#allocation2 + $0x160] sm:$0xff] %vm3480, %v3698
    %3846 = vst.msk [vmem:[#allocation2 + $0x168] sm:$0xff] %vm3480, %v3700
    %3847 = vst.msk [vmem:[#allocation2 + $0x170] sm:$0xff] %vm3480, %v3702
    %3848 = vst.msk [vmem:[#allocation2 + $0x178] sm:$0xff] %vm3480, %v3704
    %3849 = vst.msk [vmem:[#allocation2 + $0x180] sm:$0xff] %vm3480, %v3706
    %3850 = vst.msk [vmem:[#allocation2 + $0x188] sm:$0xff] %vm3480, %v3708
    %3851 = vst.msk [vmem:[#allocation2 + $0x190] sm:$0xff] %vm3480, %v3710
    %3852 = vst.msk [vmem:[#allocation2 + $0x198] sm:$0xff] %vm3480, %v3712
    %3853 = vst.msk [vmem:[#allocation2 + $0x1a0] sm:$0xff] %vm3480, %v3714
    %3854 = vst.msk [vmem:[#allocation2 + $0x1a8] sm:$0xff] %vm3480, %v3716
    %3855 = vst.msk [vmem:[#allocation2 + $0x1b0] sm:$0xff] %vm3480, %v3718
    %3856 = vst.msk [vmem:[#allocation2 + $0x1b8] sm:$0xff] %vm3480, %v3720
    %3857 = vst.msk [vmem:[#allocation2 + $0x1c0] sm:$0xff] %vm3480, %v3722
    %3858 = vst.msk [vmem:[#allocation2 + $0x1c8] sm:$0xff] %vm3480, %v3724
    %3859 = vst.msk [vmem:[#allocation2 + $0x1d0] sm:$0xff] %vm3480, %v3726
    %3860 = vst.msk [vmem:[#allocation2 + $0x1d8] sm:$0xff] %vm3480, %v3728
    %3861 = vst.msk [vmem:[#allocation2 + $0x1e0] sm:$0xff] %vm3480, %v3730
    %3862 = vst.msk [vmem:[#allocation2 + $0x1e8] sm:$0xff] %vm3480, %v3732
    %3863 = vst.msk [vmem:[#allocation2 + $0x1f0] sm:$0xff] %vm3480, %v3734
    %3864 = vst.msk [vmem:[#allocation2 + $0x1f8] sm:$0xff] %vm3480, %v3736
    // Predicated region
    $region14: #{conv_lstm_cell.1} parent=1 // pred_check
      _
    $region15: #{conv_lstm_cell.1} parent=1 // pred_check_branch
      %3866 = sbr.rel (0) target = $region17
    $region16: #{conv_lstm_cell.1} parent=1 // pred_region
      %s3868 = ssub.s32 8192, 8192
      %3869 = vsyncadd [#allocation3], %s3868
      %s3870 = sshll.u32 [#allocation2], 4
      %s3871 = int_to_ptr.vmem [resolvable:$true] %s3870
      %3876 = dma.vmem_to_hbm [thread:$0]  %s3871, 8192, %s3, [#allocation3], 128, 128, 8
    $region17: #{conv_lstm_cell.1} parent=1 // pred_fallthru
      _
    // Predicated region
    $region18: #{conv_lstm_cell.1} parent=1 // pred_check
      _
    $region19: #{conv_lstm_cell.1} parent=1 // pred_check_branch
      %3878 = sbr.rel (0) target = $region21
    $region20: #{conv_lstm_cell.1} parent=1 // pred_region
      %s3880 = ssub.s32 8192, 8192
      %3881 = vsyncadd [#allocation5], %s3880
      %s3882 = sshll.u32 [#allocation4], 4
      %s3883 = int_to_ptr.vmem [resolvable:$true] %s3882
      %3888 = dma.vmem_to_hbm [thread:$0]  %s3883, 8192, %s4, [#allocation5], 128, 128, 8
    $region21: #{conv_lstm_cell.1} parent=1 // pred_fallthru
      _
    // Predicated region
    $region22: #{conv_lstm_cell.1} parent=1 // pred_check
      _
    $region23: #{conv_lstm_cell.1} parent=1 // pred_check_branch
      %3890 = sbr.rel (0) target = $region25
    $region24: #{conv_lstm_cell.1} parent=1 // pred_region
      %3891 = dma.done [#allocation3], 8192
    $region25: #{conv_lstm_cell.1} parent=1 // pred_fallthru
      _
    // Predicated region
    $region26: #{conv_lstm_cell.1} parent=1 // pred_check
      _
    $region27: #{conv_lstm_cell.1} parent=1 // pred_check_branch
      %3893 = sbr.rel (0) target = $region29
    $region28: #{conv_lstm_cell.1} parent=1 // pred_region
      %3894 = dma.done [#allocation5], 8192
    $region29: #{conv_lstm_cell.1} parent=1 // pred_fallthru
      _
    %3895 = vsyncpa [#allocation3], 1
    %3896 = vsyncpa [#allocation5], 1

</llo_original>
